<compile_context>
chip_gen: v6e
topology: v6e:2x2x1
jax: 0.10.0
libtpu: 0.0.40
codegen_flags: <defaults>
</compile_context>

<pallas_src>
import functools

import jax
import jax.numpy as jnp
from jax.experimental import pallas as pl
from jax.experimental.pallas import tpu as pltpu

EPS = 1e-5


def _default_channel_tiles():
    # v7x has 2 TensorCores per chip -> split channels across them.
    try:
        kind = jax.devices()[0].device_kind.lower()
        if "v7" in kind or "7x" in kind:
            return 2
    except Exception:
        pass
    return 1


def _chunk_channels(tc):
    # Largest multiple of 8 that divides the channel tile and is <= 64.
    for c in (64, 32, 16, 8):
        if tc % c == 0:
            return c
    return tc


def bn_relu_kernel(x_ref, gamma_ref, beta_ref, o_ref, *, chunk):
    # x_ref: (TC, NHW) — channels on sublanes, spatial on lanes (native NCHW).
    tc, nhw = x_ref.shape
    inv_n = 1.0 / nhw
    n_chunks = tc // chunk

    def body(c, carry):
        row = pl.multiple_of(c * chunk, chunk)
        sl = pl.ds(row, chunk)

        x = x_ref[sl, :].astype(jnp.float32)                    # (chunk, NHW)
        mean = jnp.sum(x, axis=-1, keepdims=True) * inv_n       # (chunk, 1)
        d = x - mean
        var = jnp.sum(d * d, axis=-1, keepdims=True) * inv_n    # biased (train-mode)
        inv_std = jax.lax.rsqrt(var + EPS)

        scale = inv_std * gamma_ref[sl, :].astype(jnp.float32)  # (chunk, 1)
        y = d * scale + beta_ref[sl, :].astype(jnp.float32)
        o_ref[sl, :] = jnp.maximum(y, 0.0).astype(o_ref.dtype)
        return carry

    jax.lax.fori_loop(0, n_chunks, body, 0, unroll=True)


def batchnorm_relu(x_nchw, gamma, beta, *, channel_tiles=None, out_dtype=None):
    N, C, H, W = x_nchw.shape
    nhw = N * H * W
    out_dtype = out_dtype or x_nchw.dtype

    if channel_tiles is None:
        channel_tiles = _default_channel_tiles()
    if C % channel_tiles != 0 or (C // channel_tiles) % 8 != 0:
        channel_tiles = 1
    tc = C // channel_tiles
    chunk = _chunk_channels(tc)

    # Native layout: channels on sublanes, spatial on lanes. For N == 1 this
    # is a pure (free) reshape of NCHW — no data movement. For N > 1 prefer an
    # NHWC model end-to-end; the transpose below would move data.
    if N == 1:
        x_cr = x_nchw.reshape(C, nhw)
    else:
        x_cr = jnp.transpose(x_nchw, (1, 0, 2, 3)).reshape(C, nhw)

    gamma2 = gamma.reshape(C, 1).astype(jnp.float32)
    beta2 = beta.reshape(C, 1).astype(jnp.float32)

    # VMEM budget: (input + output) blocks, double-buffered, + slack.  Keeps
    # bigger batches from tripping the default scoped limit; for very large
    # NHW an NHW-tiled two-pass (stats then normalize) path would be needed.
    pad_nhw = ((nhw + 127) // 128) * 128
    blk_bytes = tc * pad_nhw * max(x_nchw.dtype.itemsize, 4)
    vmem_limit = int(min(max(4 * blk_bytes + (2 << 20), 16 << 20), 64 << 20))

    cost = pl.CostEstimate(
        flops=int(7 * nhw * C),
        transcendentals=int(C),
        bytes_accessed=int(nhw * C * (x_nchw.dtype.itemsize
                                      + jnp.dtype(out_dtype).itemsize)),
    )

    out_cr = pl.pallas_call(
        functools.partial(bn_relu_kernel, chunk=chunk),
        out_shape=jax.ShapeDtypeStruct((C, nhw), out_dtype),
        grid_spec=pltpu.PrefetchScalarGridSpec(
            num_scalar_prefetch=0,
            grid=(channel_tiles,),
            in_specs=[
                pl.BlockSpec((tc, nhw), lambda i: (i, 0)),
                pl.BlockSpec((tc, 1), lambda i: (i, 0)),
                pl.BlockSpec((tc, 1), lambda i: (i, 0)),
            ],
            out_specs=pl.BlockSpec((tc, nhw), lambda i: (i, 0)),
        ),
        compiler_params=pltpu.CompilerParams(
            dimension_semantics=("parallel",),
            vmem_limit_bytes=vmem_limit,
        ),
        cost_estimate=cost,
    )(x_cr, gamma2, beta2)

    if N == 1:
        return out_cr.reshape(N, C, H, W)
    return jnp.transpose(out_cr.reshape(C, N, H, W), (1, 0, 2, 3))


if __name__ == "__main__":
    key = jax.random.PRNGKey(0)
    kx, kg, kb = jax.random.split(key, 3)

    N, C, H, W = 1, 512, 14, 14   # matches the module's input x38
    x = jax.random.normal(kx, (N, C, H, W), dtype=jnp.float32)
    # affine=True parameters (fresh module has weight=1, bias=0; perturb to
    # exercise the affine path without changing semantics)
    gamma = 1.0 + 0.1 * jax.random.normal(kg, (C,), dtype=jnp.float32)
    beta = 0.1 * jax.random.normal(kb, (C,), dtype=jnp.float32)

    out = jax.block_until_ready(batchnorm_relu(x, gamma, beta))

    # Plain-JAX reference: training-mode BN (batch stats, biased var) + ReLU
    mean = jnp.mean(x, axis=(0, 2, 3), keepdims=True)
    var = jnp.mean((x - mean) ** 2, axis=(0, 2, 3), keepdims=True)
    ref = (x - mean) * jax.lax.rsqrt(var + EPS)
    ref = ref * gamma.reshape(1, C, 1, 1) + beta.reshape(1, C, 1, 1)
    ref = jnp.maximum(ref, 0.0)

    assert out.shape == (N, C, H, W)
    assert jnp.allclose(out, ref, atol=2e-5, rtol=2e-5), float(
        jnp.max(jnp.abs(out - ref)))
    print("KERNEL_OK")
</pallas_src>

<mosaic_0001>
module attributes {stable_mosaic.version = 11 : i64} {
  func.func @bn_relu_kernel(%arg0: i32, %arg1: memref<512x196xf32, #tpu.memory_space<vmem>>, %arg2: memref<512x1xf32, #tpu.memory_space<vmem>>, %arg3: memref<512x1xf32, #tpu.memory_space<vmem>>, %arg4: memref<512x196xf32, #tpu.memory_space<vmem>>) attributes {dimension_semantics = [#tpu.dimension_semantics<parallel>], iteration_bounds = array<i64: 1>, scalar_prefetch = 0 : i64, scratch_operands = 0 : i64, tpu.core_type = #tpu.core_type<tc>, window_params = [{transform_indices = @transform_0, window_bounds = array<i64: 512, 196>}, {transform_indices = @transform_1, window_bounds = array<i64: 512, 1>}, {transform_indices = @transform_2, window_bounds = array<i64: 512, 1>}, {transform_indices = @transform_3, window_bounds = array<i64: 512, 196>}]} {
    %c0_i32 = arith.constant 0 : i32
    %c64_i32 = arith.constant 64 : i32
    %0 = arith.muli %c0_i32, %c64_i32 : i32
    %1 = tpu.assume_multiple %0, 64 : i32
    %2 = arith.index_cast %1 : i32 to index
    %c0 = arith.constant 0 : index
    %3 = vector.load %arg1[%2, %c0] : memref<512x196xf32, #tpu.memory_space<vmem>>, vector<64x196xf32>
    %cst = arith.constant dense<0.000000e+00> : vector<64xf32>
    %4 = vector.multi_reduction <add>, %3, %cst [1] : vector<64x196xf32> to vector<64xf32>
    %5 = vector.shape_cast %4 : vector<64xf32> to vector<64x1xf32>
    %cst_0 = arith.constant 0.00510204071 : f32
    %6 = vector.broadcast %cst_0 : f32 to vector<64x1xf32>
    %7 = arith.mulf %5, %6 : vector<64x1xf32>
    %8 = vector.broadcast %7 : vector<64x1xf32> to vector<64x196xf32>
    %9 = arith.subf %3, %8 : vector<64x196xf32>
    %10 = arith.mulf %9, %9 : vector<64x196xf32>
    %cst_1 = arith.constant dense<0.000000e+00> : vector<64xf32>
    %11 = vector.multi_reduction <add>, %10, %cst_1 [1] : vector<64x196xf32> to vector<64xf32>
    %12 = vector.shape_cast %11 : vector<64xf32> to vector<64x1xf32>
    %cst_2 = arith.constant 0.00510204071 : f32
    %13 = vector.broadcast %cst_2 : f32 to vector<64x1xf32>
    %14 = arith.mulf %12, %13 : vector<64x1xf32>
    %cst_3 = arith.constant 9.99999974E-6 : f32
    %15 = vector.broadcast %cst_3 : f32 to vector<64x1xf32>
    %16 = arith.addf %14, %15 : vector<64x1xf32>
    %17 = math.rsqrt %16 : vector<64x1xf32>
    %18 = arith.index_cast %1 : i32 to index
    %c0_4 = arith.constant 0 : index
    %19 = vector.load %arg2[%18, %c0_4] : memref<512x1xf32, #tpu.memory_space<vmem>>, vector<64x1xf32>
    %20 = arith.mulf %17, %19 : vector<64x1xf32>
    %21 = vector.broadcast %20 : vector<64x1xf32> to vector<64x196xf32>
    %22 = arith.mulf %9, %21 : vector<64x196xf32>
    %23 = arith.index_cast %1 : i32 to index
    %c0_5 = arith.constant 0 : index
    %24 = vector.load %arg3[%23, %c0_5] : memref<512x1xf32, #tpu.memory_space<vmem>>, vector<64x1xf32>
    %25 = vector.broadcast %24 : vector<64x1xf32> to vector<64x196xf32>
    %26 = arith.addf %22, %25 : vector<64x196xf32>
    %cst_6 = arith.constant 0.000000e+00 : f32
    %27 = vector.broadcast %cst_6 : f32 to vector<64x196xf32>
    %28 = arith.maximumf %26, %27 : vector<64x196xf32>
    %29 = arith.index_cast %1 : i32 to index
    %c0_7 = arith.constant 0 : index
    %30 = vector.load %arg4[%29, %c0_7] : memref<512x196xf32, #tpu.memory_space<vmem>>, vector<64x196xf32>
    tpu.vector_store %arg4[%29, %c0_7], %28 {strides = array<i32>} : memref<512x196xf32, #tpu.memory_space<vmem>>, vector<64x196xf32>,
    %c1_i32 = arith.constant 1 : i32
    %c64_i32_8 = arith.constant 64 : i32
    %31 = arith.muli %c1_i32, %c64_i32_8 : i32
    %32 = tpu.assume_multiple %31, 64 : i32
    %33 = arith.index_cast %32 : i32 to index
    %c0_9 = arith.constant 0 : index
    %34 = vector.load %arg1[%33, %c0_9] : memref<512x196xf32, #tpu.memory_space<vmem>>, vector<64x196xf32>
    %cst_10 = arith.constant dense<0.000000e+00> : vector<64xf32>
    %35 = vector.multi_reduction <add>, %34, %cst_10 [1] : vector<64x196xf32> to vector<64xf32>
    %36 = vector.shape_cast %35 : vector<64xf32> to vector<64x1xf32>
    %cst_11 = arith.constant 0.00510204071 : f32
    %37 = vector.broadcast %cst_11 : f32 to vector<64x1xf32>
    %38 = arith.mulf %36, %37 : vector<64x1xf32>
    %39 = vector.broadcast %38 : vector<64x1xf32> to vector<64x196xf32>
    %40 = arith.subf %34, %39 : vector<64x196xf32>
    %41 = arith.mulf %40, %40 : vector<64x196xf32>
    %cst_12 = arith.constant dense<0.000000e+00> : vector<64xf32>
    %42 = vector.multi_reduction <add>, %41, %cst_12 [1] : vector<64x196xf32> to vector<64xf32>
    %43 = vector.shape_cast %42 : vector<64xf32> to vector<64x1xf32>
    %cst_13 = arith.constant 0.00510204071 : f32
    %44 = vector.broadcast %cst_13 : f32 to vector<64x1xf32>
    %45 = arith.mulf %43, %44 : vector<64x1xf32>
    %cst_14 = arith.constant 9.99999974E-6 : f32
    %46 = vector.broadcast %cst_14 : f32 to vector<64x1xf32>
    %47 = arith.addf %45, %46 : vector<64x1xf32>
    %48 = math.rsqrt %47 : vector<64x1xf32>
    %49 = arith.index_cast %32 : i32 to index
    %c0_15 = arith.constant 0 : index
    %50 = vector.load %arg2[%49, %c0_15] : memref<512x1xf32, #tpu.memory_space<vmem>>, vector<64x1xf32>
    %51 = arith.mulf %48, %50 : vector<64x1xf32>
    %52 = vector.broadcast %51 : vector<64x1xf32> to vector<64x196xf32>
    %53 = arith.mulf %40, %52 : vector<64x196xf32>
    %54 = arith.index_cast %32 : i32 to index
    %c0_16 = arith.constant 0 : index
    %55 = vector.load %arg3[%54, %c0_16] : memref<512x1xf32, #tpu.memory_space<vmem>>, vector<64x1xf32>
    %56 = vector.broadcast %55 : vector<64x1xf32> to vector<64x196xf32>
    %57 = arith.addf %53, %56 : vector<64x196xf32>
    %cst_17 = arith.constant 0.000000e+00 : f32
    %58 = vector.broadcast %cst_17 : f32 to vector<64x196xf32>
    %59 = arith.maximumf %57, %58 : vector<64x196xf32>
    %60 = arith.index_cast %32 : i32 to index
    %c0_18 = arith.constant 0 : index
    %61 = vector.load %arg4[%60, %c0_18] : memref<512x196xf32, #tpu.memory_space<vmem>>, vector<64x196xf32>
    tpu.vector_store %arg4[%60, %c0_18], %59 {strides = array<i32>} : memref<512x196xf32, #tpu.memory_space<vmem>>, vector<64x196xf32>,
    %c2_i32 = arith.constant 2 : i32
    %c64_i32_19 = arith.constant 64 : i32
    %62 = arith.muli %c2_i32, %c64_i32_19 : i32
    %63 = tpu.assume_multiple %62, 64 : i32
    %64 = arith.index_cast %63 : i32 to index
    %c0_20 = arith.constant 0 : index
    %65 = vector.load %arg1[%64, %c0_20] : memref<512x196xf32, #tpu.memory_space<vmem>>, vector<64x196xf32>
    %cst_21 = arith.constant dense<0.000000e+00> : vector<64xf32>
    %66 = vector.multi_reduction <add>, %65, %cst_21 [1] : vector<64x196xf32> to vector<64xf32>
    %67 = vector.shape_cast %66 : vector<64xf32> to vector<64x1xf32>
    %cst_22 = arith.constant 0.00510204071 : f32
    %68 = vector.broadcast %cst_22 : f32 to vector<64x1xf32>
    %69 = arith.mulf %67, %68 : vector<64x1xf32>
    %70 = vector.broadcast %69 : vector<64x1xf32> to vector<64x196xf32>
    %71 = arith.subf %65, %70 : vector<64x196xf32>
    %72 = arith.mulf %71, %71 : vector<64x196xf32>
    %cst_23 = arith.constant dense<0.000000e+00> : vector<64xf32>
    %73 = vector.multi_reduction <add>, %72, %cst_23 [1] : vector<64x196xf32> to vector<64xf32>
    %74 = vector.shape_cast %73 : vector<64xf32> to vector<64x1xf32>
    %cst_24 = arith.constant 0.00510204071 : f32
    %75 = vector.broadcast %cst_24 : f32 to vector<64x1xf32>
    %76 = arith.mulf %74, %75 : vector<64x1xf32>
    %cst_25 = arith.constant 9.99999974E-6 : f32
    %77 = vector.broadcast %cst_25 : f32 to vector<64x1xf32>
    %78 = arith.addf %76, %77 : vector<64x1xf32>
    %79 = math.rsqrt %78 : vector<64x1xf32>
    %80 = arith.index_cast %63 : i32 to index
    %c0_26 = arith.constant 0 : index
    %81 = vector.load %arg2[%80, %c0_26] : memref<512x1xf32, #tpu.memory_space<vmem>>, vector<64x1xf32>
    %82 = arith.mulf %79, %81 : vector<64x1xf32>
    %83 = vector.broadcast %82 : vector<64x1xf32> to vector<64x196xf32>
    %84 = arith.mulf %71, %83 : vector<64x196xf32>
    %85 = arith.index_cast %63 : i32 to index
    %c0_27 = arith.constant 0 : index
    %86 = vector.load %arg3[%85, %c0_27] : memref<512x1xf32, #tpu.memory_space<vmem>>, vector<64x1xf32>
    %87 = vector.broadcast %86 : vector<64x1xf32> to vector<64x196xf32>
    %88 = arith.addf %84, %87 : vector<64x196xf32>
    %cst_28 = arith.constant 0.000000e+00 : f32
    %89 = vector.broadcast %cst_28 : f32 to vector<64x196xf32>
    %90 = arith.maximumf %88, %89 : vector<64x196xf32>
    %91 = arith.index_cast %63 : i32 to index
    %c0_29 = arith.constant 0 : index
    %92 = vector.load %arg4[%91, %c0_29] : memref<512x196xf32, #tpu.memory_space<vmem>>, vector<64x196xf32>
    tpu.vector_store %arg4[%91, %c0_29], %90 {strides = array<i32>} : memref<512x196xf32, #tpu.memory_space<vmem>>, vector<64x196xf32>,
    %c3_i32 = arith.constant 3 : i32
    %c64_i32_30 = arith.constant 64 : i32
    %93 = arith.muli %c3_i32, %c64_i32_30 : i32
    %94 = tpu.assume_multiple %93, 64 : i32
    %95 = arith.index_cast %94 : i32 to index
    %c0_31 = arith.constant 0 : index
    %96 = vector.load %arg1[%95, %c0_31] : memref<512x196xf32, #tpu.memory_space<vmem>>, vector<64x196xf32>
    %cst_32 = arith.constant dense<0.000000e+00> : vector<64xf32>
    %97 = vector.multi_reduction <add>, %96, %cst_32 [1] : vector<64x196xf32> to vector<64xf32>
    %98 = vector.shape_cast %97 : vector<64xf32> to vector<64x1xf32>
    %cst_33 = arith.constant 0.00510204071 : f32
    %99 = vector.broadcast %cst_33 : f32 to vector<64x1xf32>
    %100 = arith.mulf %98, %99 : vector<64x1xf32>
    %101 = vector.broadcast %100 : vector<64x1xf32> to vector<64x196xf32>
    %102 = arith.subf %96, %101 : vector<64x196xf32>
    %103 = arith.mulf %102, %102 : vector<64x196xf32>
    %cst_34 = arith.constant dense<0.000000e+00> : vector<64xf32>
    %104 = vector.multi_reduction <add>, %103, %cst_34 [1] : vector<64x196xf32> to vector<64xf32>
    %105 = vector.shape_cast %104 : vector<64xf32> to vector<64x1xf32>
    %cst_35 = arith.constant 0.00510204071 : f32
    %106 = vector.broadcast %cst_35 : f32 to vector<64x1xf32>
    %107 = arith.mulf %105, %106 : vector<64x1xf32>
    %cst_36 = arith.constant 9.99999974E-6 : f32
    %108 = vector.broadcast %cst_36 : f32 to vector<64x1xf32>
    %109 = arith.addf %107, %108 : vector<64x1xf32>
    %110 = math.rsqrt %109 : vector<64x1xf32>
    %111 = arith.index_cast %94 : i32 to index
    %c0_37 = arith.constant 0 : index
    %112 = vector.load %arg2[%111, %c0_37] : memref<512x1xf32, #tpu.memory_space<vmem>>, vector<64x1xf32>
    %113 = arith.mulf %110, %112 : vector<64x1xf32>
    %114 = vector.broadcast %113 : vector<64x1xf32> to vector<64x196xf32>
    %115 = arith.mulf %102, %114 : vector<64x196xf32>
    %116 = arith.index_cast %94 : i32 to index
    %c0_38 = arith.constant 0 : index
    %117 = vector.load %arg3[%116, %c0_38] : memref<512x1xf32, #tpu.memory_space<vmem>>, vector<64x1xf32>
    %118 = vector.broadcast %117 : vector<64x1xf32> to vector<64x196xf32>
    %119 = arith.addf %115, %118 : vector<64x196xf32>
    %cst_39 = arith.constant 0.000000e+00 : f32
    %120 = vector.broadcast %cst_39 : f32 to vector<64x196xf32>
    %121 = arith.maximumf %119, %120 : vector<64x196xf32>
    %122 = arith.index_cast %94 : i32 to index
    %c0_40 = arith.constant 0 : index
    %123 = vector.load %arg4[%122, %c0_40] : memref<512x196xf32, #tpu.memory_space<vmem>>, vector<64x196xf32>
    tpu.vector_store %arg4[%122, %c0_40], %121 {strides = array<i32>} : memref<512x196xf32, #tpu.memory_space<vmem>>, vector<64x196xf32>,
    %c4_i32 = arith.constant 4 : i32
    %c64_i32_41 = arith.constant 64 : i32
    %124 = arith.muli %c4_i32, %c64_i32_41 : i32
    %125 = tpu.assume_multiple %124, 64 : i32
    %126 = arith.index_cast %125 : i32 to index
    %c0_42 = arith.constant 0 : index
    %127 = vector.load %arg1[%126, %c0_42] : memref<512x196xf32, #tpu.memory_space<vmem>>, vector<64x196xf32>
    %cst_43 = arith.constant dense<0.000000e+00> : vector<64xf32>
    %128 = vector.multi_reduction <add>, %127, %cst_43 [1] : vector<64x196xf32> to vector<64xf32>
    %129 = vector.shape_cast %128 : vector<64xf32> to vector<64x1xf32>
    %cst_44 = arith.constant 0.00510204071 : f32
    %130 = vector.broadcast %cst_44 : f32 to vector<64x1xf32>
    %131 = arith.mulf %129, %130 : vector<64x1xf32>
    %132 = vector.broadcast %131 : vector<64x1xf32> to vector<64x196xf32>
    %133 = arith.subf %127, %132 : vector<64x196xf32>
    %134 = arith.mulf %133, %133 : vector<64x196xf32>
    %cst_45 = arith.constant dense<0.000000e+00> : vector<64xf32>
    %135 = vector.multi_reduction <add>, %134, %cst_45 [1] : vector<64x196xf32> to vector<64xf32>
    %136 = vector.shape_cast %135 : vector<64xf32> to vector<64x1xf32>
    %cst_46 = arith.constant 0.00510204071 : f32
    %137 = vector.broadcast %cst_46 : f32 to vector<64x1xf32>
    %138 = arith.mulf %136, %137 : vector<64x1xf32>
    %cst_47 = arith.constant 9.99999974E-6 : f32
    %139 = vector.broadcast %cst_47 : f32 to vector<64x1xf32>
    %140 = arith.addf %138, %139 : vector<64x1xf32>
    %141 = math.rsqrt %140 : vector<64x1xf32>
    %142 = arith.index_cast %125 : i32 to index
    %c0_48 = arith.constant 0 : index
    %143 = vector.load %arg2[%142, %c0_48] : memref<512x1xf32, #tpu.memory_space<vmem>>, vector<64x1xf32>
    %144 = arith.mulf %141, %143 : vector<64x1xf32>
    %145 = vector.broadcast %144 : vector<64x1xf32> to vector<64x196xf32>
    %146 = arith.mulf %133, %145 : vector<64x196xf32>
    %147 = arith.index_cast %125 : i32 to index
    %c0_49 = arith.constant 0 : index
    %148 = vector.load %arg3[%147, %c0_49] : memref<512x1xf32, #tpu.memory_space<vmem>>, vector<64x1xf32>
    %149 = vector.broadcast %148 : vector<64x1xf32> to vector<64x196xf32>
    %150 = arith.addf %146, %149 : vector<64x196xf32>
    %cst_50 = arith.constant 0.000000e+00 : f32
    %151 = vector.broadcast %cst_50 : f32 to vector<64x196xf32>
    %152 = arith.maximumf %150, %151 : vector<64x196xf32>
    %153 = arith.index_cast %125 : i32 to index
    %c0_51 = arith.constant 0 : index
    %154 = vector.load %arg4[%153, %c0_51] : memref<512x196xf32, #tpu.memory_space<vmem>>, vector<64x196xf32>
    tpu.vector_store %arg4[%153, %c0_51], %152 {strides = array<i32>} : memref<512x196xf32, #tpu.memory_space<vmem>>, vector<64x196xf32>,
    %c5_i32 = arith.constant 5 : i32
    %c64_i32_52 = arith.constant 64 : i32
    %155 = arith.muli %c5_i32, %c64_i32_52 : i32
    %156 = tpu.assume_multiple %155, 64 : i32
    %157 = arith.index_cast %156 : i32 to index
    %c0_53 = arith.constant 0 : index
    %158 = vector.load %arg1[%157, %c0_53] : memref<512x196xf32, #tpu.memory_space<vmem>>, vector<64x196xf32>
    %cst_54 = arith.constant dense<0.000000e+00> : vector<64xf32>
    %159 = vector.multi_reduction <add>, %158, %cst_54 [1] : vector<64x196xf32> to vector<64xf32>
    %160 = vector.shape_cast %159 : vector<64xf32> to vector<64x1xf32>
    %cst_55 = arith.constant 0.00510204071 : f32
    %161 = vector.broadcast %cst_55 : f32 to vector<64x1xf32>
    %162 = arith.mulf %160, %161 : vector<64x1xf32>
    %163 = vector.broadcast %162 : vector<64x1xf32> to vector<64x196xf32>
    %164 = arith.subf %158, %163 : vector<64x196xf32>
    %165 = arith.mulf %164, %164 : vector<64x196xf32>
    %cst_56 = arith.constant dense<0.000000e+00> : vector<64xf32>
    %166 = vector.multi_reduction <add>, %165, %cst_56 [1] : vector<64x196xf32> to vector<64xf32>
    %167 = vector.shape_cast %166 : vector<64xf32> to vector<64x1xf32>
    %cst_57 = arith.constant 0.00510204071 : f32
    %168 = vector.broadcast %cst_57 : f32 to vector<64x1xf32>
    %169 = arith.mulf %167, %168 : vector<64x1xf32>
    %cst_58 = arith.constant 9.99999974E-6 : f32
    %170 = vector.broadcast %cst_58 : f32 to vector<64x1xf32>
    %171 = arith.addf %169, %170 : vector<64x1xf32>
    %172 = math.rsqrt %171 : vector<64x1xf32>
    %173 = arith.index_cast %156 : i32 to index
    %c0_59 = arith.constant 0 : index
    %174 = vector.load %arg2[%173, %c0_59] : memref<512x1xf32, #tpu.memory_space<vmem>>, vector<64x1xf32>
    %175 = arith.mulf %172, %174 : vector<64x1xf32>
    %176 = vector.broadcast %175 : vector<64x1xf32> to vector<64x196xf32>
    %177 = arith.mulf %164, %176 : vector<64x196xf32>
    %178 = arith.index_cast %156 : i32 to index
    %c0_60 = arith.constant 0 : index
    %179 = vector.load %arg3[%178, %c0_60] : memref<512x1xf32, #tpu.memory_space<vmem>>, vector<64x1xf32>
    %180 = vector.broadcast %179 : vector<64x1xf32> to vector<64x196xf32>
    %181 = arith.addf %177, %180 : vector<64x196xf32>
    %cst_61 = arith.constant 0.000000e+00 : f32
    %182 = vector.broadcast %cst_61 : f32 to vector<64x196xf32>
    %183 = arith.maximumf %181, %182 : vector<64x196xf32>
    %184 = arith.index_cast %156 : i32 to index
    %c0_62 = arith.constant 0 : index
    %185 = vector.load %arg4[%184, %c0_62] : memref<512x196xf32, #tpu.memory_space<vmem>>, vector<64x196xf32>
    tpu.vector_store %arg4[%184, %c0_62], %183 {strides = array<i32>} : memref<512x196xf32, #tpu.memory_space<vmem>>, vector<64x196xf32>,
    %c6_i32 = arith.constant 6 : i32
    %c64_i32_63 = arith.constant 64 : i32
    %186 = arith.muli %c6_i32, %c64_i32_63 : i32
    %187 = tpu.assume_multiple %186, 64 : i32
    %188 = arith.index_cast %187 : i32 to index
    %c0_64 = arith.constant 0 : index
    %189 = vector.load %arg1[%188, %c0_64] : memref<512x196xf32, #tpu.memory_space<vmem>>, vector<64x196xf32>
    %cst_65 = arith.constant dense<0.000000e+00> : vector<64xf32>
    %190 = vector.multi_reduction <add>, %189, %cst_65 [1] : vector<64x196xf32> to vector<64xf32>
    %191 = vector.shape_cast %190 : vector<64xf32> to vector<64x1xf32>
    %cst_66 = arith.constant 0.00510204071 : f32
    %192 = vector.broadcast %cst_66 : f32 to vector<64x1xf32>
    %193 = arith.mulf %191, %192 : vector<64x1xf32>
    %194 = vector.broadcast %193 : vector<64x1xf32> to vector<64x196xf32>
    %195 = arith.subf %189, %194 : vector<64x196xf32>
    %196 = arith.mulf %195, %195 : vector<64x196xf32>
    %cst_67 = arith.constant dense<0.000000e+00> : vector<64xf32>
    %197 = vector.multi_reduction <add>, %196, %cst_67 [1] : vector<64x196xf32> to vector<64xf32>
    %198 = vector.shape_cast %197 : vector<64xf32> to vector<64x1xf32>
    %cst_68 = arith.constant 0.00510204071 : f32
    %199 = vector.broadcast %cst_68 : f32 to vector<64x1xf32>
    %200 = arith.mulf %198, %199 : vector<64x1xf32>
    %cst_69 = arith.constant 9.99999974E-6 : f32
    %201 = vector.broadcast %cst_69 : f32 to vector<64x1xf32>
    %202 = arith.addf %200, %201 : vector<64x1xf32>
    %203 = math.rsqrt %202 : vector<64x1xf32>
    %204 = arith.index_cast %187 : i32 to index
    %c0_70 = arith.constant 0 : index
    %205 = vector.load %arg2[%204, %c0_70] : memref<512x1xf32, #tpu.memory_space<vmem>>, vector<64x1xf32>
    %206 = arith.mulf %203, %205 : vector<64x1xf32>
    %207 = vector.broadcast %206 : vector<64x1xf32> to vector<64x196xf32>
    %208 = arith.mulf %195, %207 : vector<64x196xf32>
    %209 = arith.index_cast %187 : i32 to index
    %c0_71 = arith.constant 0 : index
    %210 = vector.load %arg3[%209, %c0_71] : memref<512x1xf32, #tpu.memory_space<vmem>>, vector<64x1xf32>
    %211 = vector.broadcast %210 : vector<64x1xf32> to vector<64x196xf32>
    %212 = arith.addf %208, %211 : vector<64x196xf32>
    %cst_72 = arith.constant 0.000000e+00 : f32
    %213 = vector.broadcast %cst_72 : f32 to vector<64x196xf32>
    %214 = arith.maximumf %212, %213 : vector<64x196xf32>
    %215 = arith.index_cast %187 : i32 to index
    %c0_73 = arith.constant 0 : index
    %216 = vector.load %arg4[%215, %c0_73] : memref<512x196xf32, #tpu.memory_space<vmem>>, vector<64x196xf32>
    tpu.vector_store %arg4[%215, %c0_73], %214 {strides = array<i32>} : memref<512x196xf32, #tpu.memory_space<vmem>>, vector<64x196xf32>,
    %c7_i32 = arith.constant 7 : i32
    %c64_i32_74 = arith.constant 64 : i32
    %217 = arith.muli %c7_i32, %c64_i32_74 : i32
    %218 = tpu.assume_multiple %217, 64 : i32
    %219 = arith.index_cast %218 : i32 to index
    %c0_75 = arith.constant 0 : index
    %220 = vector.load %arg1[%219, %c0_75] : memref<512x196xf32, #tpu.memory_space<vmem>>, vector<64x196xf32>
    %cst_76 = arith.constant dense<0.000000e+00> : vector<64xf32>
    %221 = vector.multi_reduction <add>, %220, %cst_76 [1] : vector<64x196xf32> to vector<64xf32>
    %222 = vector.shape_cast %221 : vector<64xf32> to vector<64x1xf32>
    %cst_77 = arith.constant 0.00510204071 : f32
    %223 = vector.broadcast %cst_77 : f32 to vector<64x1xf32>
    %224 = arith.mulf %222, %223 : vector<64x1xf32>
    %225 = vector.broadcast %224 : vector<64x1xf32> to vector<64x196xf32>
    %226 = arith.subf %220, %225 : vector<64x196xf32>
    %227 = arith.mulf %226, %226 : vector<64x196xf32>
    %cst_78 = arith.constant dense<0.000000e+00> : vector<64xf32>
    %228 = vector.multi_reduction <add>, %227, %cst_78 [1] : vector<64x196xf32> to vector<64xf32>
    %229 = vector.shape_cast %228 : vector<64xf32> to vector<64x1xf32>
    %cst_79 = arith.constant 0.00510204071 : f32
    %230 = vector.broadcast %cst_79 : f32 to vector<64x1xf32>
    %231 = arith.mulf %229, %230 : vector<64x1xf32>
    %cst_80 = arith.constant 9.99999974E-6 : f32
    %232 = vector.broadcast %cst_80 : f32 to vector<64x1xf32>
    %233 = arith.addf %231, %232 : vector<64x1xf32>
    %234 = math.rsqrt %233 : vector<64x1xf32>
    %235 = arith.index_cast %218 : i32 to index
    %c0_81 = arith.constant 0 : index
    %236 = vector.load %arg2[%235, %c0_81] : memref<512x1xf32, #tpu.memory_space<vmem>>, vector<64x1xf32>
    %237 = arith.mulf %234, %236 : vector<64x1xf32>
    %238 = vector.broadcast %237 : vector<64x1xf32> to vector<64x196xf32>
    %239 = arith.mulf %226, %238 : vector<64x196xf32>
    %240 = arith.index_cast %218 : i32 to index
    %c0_82 = arith.constant 0 : index
    %241 = vector.load %arg3[%240, %c0_82] : memref<512x1xf32, #tpu.memory_space<vmem>>, vector<64x1xf32>
    %242 = vector.broadcast %241 : vector<64x1xf32> to vector<64x196xf32>
    %243 = arith.addf %239, %242 : vector<64x196xf32>
    %cst_83 = arith.constant 0.000000e+00 : f32
    %244 = vector.broadcast %cst_83 : f32 to vector<64x196xf32>
    %245 = arith.maximumf %243, %244 : vector<64x196xf32>
    %246 = arith.index_cast %218 : i32 to index
    %c0_84 = arith.constant 0 : index
    %247 = vector.load %arg4[%246, %c0_84] : memref<512x196xf32, #tpu.memory_space<vmem>>, vector<64x196xf32>
    tpu.vector_store %arg4[%246, %c0_84], %245 {strides = array<i32>} : memref<512x196xf32, #tpu.memory_space<vmem>>, vector<64x196xf32>,
    %c8_i32 = arith.constant 8 : i32
    return
  }
  func.func @transform_0(%arg0: i32) -> (i32, i32) {
    %c0_i32 = arith.constant 0 : i32
    %c0_i32_0 = arith.constant 0 : i32
    return %arg0, %c0_i32 : i32, i32
  }
  func.func @transform_1(%arg0: i32) -> (i32, i32) {
    %c0_i32 = arith.constant 0 : i32
    %c0_i32_0 = arith.constant 0 : i32
    return %arg0, %c0_i32 : i32, i32
  }
  func.func @transform_2(%arg0: i32) -> (i32, i32) {
    %c0_i32 = arith.constant 0 : i32
    %c0_i32_0 = arith.constant 0 : i32
    return %arg0, %c0_i32 : i32, i32
  }
  func.func @transform_3(%arg0: i32) -> (i32, i32) {
    %c0_i32 = arith.constant 0 : i32
    %c0_i32_0 = arith.constant 0 : i32
    return %arg0, %c0_i32 : i32, i32
  }
}

</mosaic_0001>

<llo_original>
// kernel: tpu_custom_call.1
$region0: #{tpu_custom_call.1}
  #allocation0 [shape = 'u32[]', space=smem, size = 0x4, offset = 0x4, fixed_abs, tag = 'smem constant byte address 0x4 - core index']
  #allocation1 [shape = 'u32[144,128]{1,0:T(1,128)}', space=vmem, size = 0x12000, scoped, tag = 'internal scratch']
  %s0 = inlined_call_operand.vmem [shape: f32[512,196], index: 0, kind: input, shape index: {}]
  %s1 = inlined_call_operand.vmem [shape: f32[512,1], index: 1, kind: input, shape index: {}]
  %s2 = inlined_call_operand.vmem [shape: f32[512,1], index: 2, kind: input, shape index: {}]
  %s3 = inlined_call_operand.vmem [shape: f32[512,196], index: 3, kind: output, shape index: {}]
  %s4 = sld [smem:[#allocation0]]
  $region22: #{tpu_custom_call.1} parent=0
    _
  %s6 = ssub.s32 1, %s4
  %s7 = scalar_select 0, %s6, %s4
  // Predicated region
  $region2: #{tpu_custom_call.1} parent=0 // pred_check
    _
  $region3: #{tpu_custom_call.1} parent=0 // pred_check_branch
    %9 = sbr.rel (0) target = $region5
  $region4: #{tpu_custom_call.1} parent=0 // pred_region
    _
  $region5: #{tpu_custom_call.1} parent=0 // pred_fallthru
    _
  // Predicated region
  $region6: #{tpu_custom_call.1} parent=0 // pred_check
    _
  $region7: #{tpu_custom_call.1} parent=0 // pred_check_branch
    %11 = sbr.rel (0) target = $region9
  $region8: #{tpu_custom_call.1} parent=0 // pred_region
    _
  $region9: #{tpu_custom_call.1} parent=0 // pred_fallthru
    _
  // Predicated region
  $region10: #{tpu_custom_call.1} parent=0 // pred_check
    _
  $region11: #{tpu_custom_call.1} parent=0 // pred_check_branch
    %13 = sbr.rel (0) target = $region13
  $region12: #{tpu_custom_call.1} parent=0 // pred_region
    _
  $region13: #{tpu_custom_call.1} parent=0 // pred_fallthru
    _
  %s14 = smul.u32 0, 2
  %s15 = smul.addr %s14, 8
  %s16 = scalar_lea.vmem %s0, %s15
  %v17 = vld [vmem:[%s16] sm:$0xff]
  %v18 = vld [vmem:[%s16 + $0x8] sm:$0xff]
  %v19 = vld [vmem:[%s16 + $0x10] sm:$0xff]
  %v20 = vld [vmem:[%s16 + $0x18] sm:$0xff]
  %v21 = vld [vmem:[%s16 + $0x20] sm:$0xff]
  %v22 = vld [vmem:[%s16 + $0x28] sm:$0xff]
  %v23 = vld [vmem:[%s16 + $0x30] sm:$0xff]
  %v24 = vld [vmem:[%s16 + $0x38] sm:$0xff]
  %v25 = vld [vmem:[%s16 + $0x40] sm:$0xff]
  %v26 = vld [vmem:[%s16 + $0x48] sm:$0xff]
  %v27 = vld [vmem:[%s16 + $0x50] sm:$0xff]
  %v28 = vld [vmem:[%s16 + $0x58] sm:$0xff]
  %v29 = vld [vmem:[%s16 + $0x60] sm:$0xff]
  %v30 = vld [vmem:[%s16 + $0x68] sm:$0xff]
  %v31 = vld [vmem:[%s16 + $0x70] sm:$0xff]
  %v32 = vld [vmem:[%s16 + $0x78] sm:$0xff]
  %vm33 = vcmask 556032
  %v34 = vsel %vm33, %v18, 0.0
  %v35 = vadd.f32 %v17, %v34
  %36 = vadd.xlane.f32.xlu0 %v35
  %v37 = vpop.xlane.xlu0 %36
  %v38 = vsel %vm33, %v20, 0.0
  %v39 = vadd.f32 %v19, %v38
  %40 = vadd.xlane.f32.xlu0 %v39
  %v41 = vpop.xlane.xlu0 %40
  %v42 = vsel %vm33, %v22, 0.0
  %v43 = vadd.f32 %v21, %v42
  %44 = vadd.xlane.f32.xlu0 %v43
  %v45 = vpop.xlane.xlu0 %44
  %v46 = vsel %vm33, %v24, 0.0
  %v47 = vadd.f32 %v23, %v46
  %48 = vadd.xlane.f32.xlu0 %v47
  %v49 = vpop.xlane.xlu0 %48
  %v50 = vsel %vm33, %v26, 0.0
  %v51 = vadd.f32 %v25, %v50
  %52 = vadd.xlane.f32.xlu0 %v51
  %v53 = vpop.xlane.xlu0 %52
  %v54 = vsel %vm33, %v28, 0.0
  %v55 = vadd.f32 %v27, %v54
  %56 = vadd.xlane.f32.xlu0 %v55
  %v57 = vpop.xlane.xlu0 %56
  %v58 = vsel %vm33, %v30, 0.0
  %v59 = vadd.f32 %v29, %v58
  %60 = vadd.xlane.f32.xlu0 %v59
  %v61 = vpop.xlane.xlu0 %60
  %v62 = vsel %vm33, %v32, 0.0
  %v63 = vadd.f32 %v31, %v62
  %64 = vadd.xlane.f32.xlu0 %v63
  %v65 = vpop.xlane.xlu0 %64
  %v66 = vmul.f32 %v37, 0.0051020407
  %v67 = vmul.f32 %v41, 0.0051020407
  %v68 = vmul.f32 %v45, 0.0051020407
  %v69 = vmul.f32 %v49, 0.0051020407
  %v70 = vmul.f32 %v53, 0.0051020407
  %v71 = vmul.f32 %v57, 0.0051020407
  %v72 = vmul.f32 %v61, 0.0051020407
  %v73 = vmul.f32 %v65, 0.0051020407
  %v74 = vsub.f32 %v17, %v66
  %v75 = vsub.f32 %v18, %v66
  %v76 = vsub.f32 %v19, %v67
  %v77 = vsub.f32 %v20, %v67
  %v78 = vsub.f32 %v21, %v68
  %v79 = vsub.f32 %v22, %v68
  %v80 = vsub.f32 %v23, %v69
  %v81 = vsub.f32 %v24, %v69
  %v82 = vsub.f32 %v25, %v70
  %v83 = vsub.f32 %v26, %v70
  %v84 = vsub.f32 %v27, %v71
  %v85 = vsub.f32 %v28, %v71
  %v86 = vsub.f32 %v29, %v72
  %v87 = vsub.f32 %v30, %v72
  %v88 = vsub.f32 %v31, %v73
  %v89 = vsub.f32 %v32, %v73
  %v90 = vmul.f32 %v74, %v74
  %v91 = vmul.f32 %v75, %v75
  %v92 = vmul.f32 %v76, %v76
  %v93 = vmul.f32 %v77, %v77
  %v94 = vmul.f32 %v78, %v78
  %v95 = vmul.f32 %v79, %v79
  %v96 = vmul.f32 %v80, %v80
  %v97 = vmul.f32 %v81, %v81
  %v98 = vmul.f32 %v82, %v82
  %v99 = vmul.f32 %v83, %v83
  %v100 = vmul.f32 %v84, %v84
  %v101 = vmul.f32 %v85, %v85
  %v102 = vmul.f32 %v86, %v86
  %v103 = vmul.f32 %v87, %v87
  %v104 = vmul.f32 %v88, %v88
  %v105 = vmul.f32 %v89, %v89
  %v106 = vsel %vm33, %v91, 0.0
  %v107 = vadd.f32 %v90, %v106
  %108 = vadd.xlane.f32.xlu0 %v107
  %v109 = vpop.xlane.xlu0 %108
  %v110 = vsel %vm33, %v93, 0.0
  %v111 = vadd.f32 %v92, %v110
  %112 = vadd.xlane.f32.xlu0 %v111
  %v113 = vpop.xlane.xlu0 %112
  %v114 = vsel %vm33, %v95, 0.0
  %v115 = vadd.f32 %v94, %v114
  %116 = vadd.xlane.f32.xlu0 %v115
  %v117 = vpop.xlane.xlu0 %116
  %v118 = vsel %vm33, %v97, 0.0
  %v119 = vadd.f32 %v96, %v118
  %120 = vadd.xlane.f32.xlu0 %v119
  %v121 = vpop.xlane.xlu0 %120
  %v122 = vsel %vm33, %v99, 0.0
  %v123 = vadd.f32 %v98, %v122
  %124 = vadd.xlane.f32.xlu0 %v123
  %v125 = vpop.xlane.xlu0 %124
  %v126 = vsel %vm33, %v101, 0.0
  %v127 = vadd.f32 %v100, %v126
  %128 = vadd.xlane.f32.xlu0 %v127
  %v129 = vpop.xlane.xlu0 %128
  %v130 = vsel %vm33, %v103, 0.0
  %v131 = vadd.f32 %v102, %v130
  %132 = vadd.xlane.f32.xlu0 %v131
  %v133 = vpop.xlane.xlu0 %132
  %v134 = vsel %vm33, %v105, 0.0
  %v135 = vadd.f32 %v104, %v134
  %136 = vadd.xlane.f32.xlu0 %v135
  %v137 = vpop.xlane.xlu0 %136
  %v138 = vmul.f32 %v109, 0.0051020407
  %v139 = vmul.f32 %v113, 0.0051020407
  %v140 = vmul.f32 %v117, 0.0051020407
  %v141 = vmul.f32 %v121, 0.0051020407
  %v142 = vmul.f32 %v125, 0.0051020407
  %v143 = vmul.f32 %v129, 0.0051020407
  %v144 = vmul.f32 %v133, 0.0051020407
  %v145 = vmul.f32 %v137, 0.0051020407
  %v146 = vadd.f32 %v138, 1e-05
  %v147 = vadd.f32 %v139, 1e-05
  %v148 = vadd.f32 %v140, 1e-05
  %v149 = vadd.f32 %v141, 1e-05
  %v150 = vadd.f32 %v142, 1e-05
  %v151 = vadd.f32 %v143, 1e-05
  %v152 = vadd.f32 %v144, 1e-05
  %v153 = vadd.f32 %v145, 1e-05
  %v154 = vrsqrt.pop %v146
  %v155 = vrsqrt.pop %v147
  %v156 = vrsqrt.pop %v148
  %v157 = vrsqrt.pop %v149
  %v158 = vrsqrt.pop %v150
  %v159 = vrsqrt.pop %v151
  %v160 = vrsqrt.pop %v152
  %v161 = vrsqrt.pop %v153
  %v162 = vld [vmem:[%s1] sm:$0xff]
  %v163 = vld [vmem:[%s1 + $0x8] sm:$0xff]
  %v164 = vld [vmem:[%s1 + $0x10] sm:$0xff]
  %v165 = vld [vmem:[%s1 + $0x18] sm:$0xff]
  %v166 = vld [vmem:[%s1 + $0x20] sm:$0xff]
  %v167 = vld [vmem:[%s1 + $0x28] sm:$0xff]
  %v168 = vld [vmem:[%s1 + $0x30] sm:$0xff]
  %v169 = vld [vmem:[%s1 + $0x38] sm:$0xff]
  %v170 = vmul.f32 %v154, %v162
  %v171 = vmul.f32 %v155, %v163
  %v172 = vmul.f32 %v156, %v164
  %v173 = vmul.f32 %v157, %v165
  %v174 = vmul.f32 %v158, %v166
  %v175 = vmul.f32 %v159, %v167
  %v176 = vmul.f32 %v160, %v168
  %v177 = vmul.f32 %v161, %v169
  %179 = vset.pattern.permute.xlu0 0
  %180 = vperm.xlu0 %179, %v170
  %v181 = vpop.permute.xlu0 %180
  %184 = vset.pattern.permute.xlu0 0
  %185 = vperm.xlu0 %184, %v171
  %v186 = vpop.permute.xlu0 %185
  %189 = vset.pattern.permute.xlu0 0
  %190 = vperm.xlu0 %189, %v172
  %v191 = vpop.permute.xlu0 %190
  %194 = vset.pattern.permute.xlu0 0
  %195 = vperm.xlu0 %194, %v173
  %v196 = vpop.permute.xlu0 %195
  %199 = vset.pattern.permute.xlu0 0
  %200 = vperm.xlu0 %199, %v174
  %v201 = vpop.permute.xlu0 %200
  %204 = vset.pattern.permute.xlu0 0
  %205 = vperm.xlu0 %204, %v175
  %v206 = vpop.permute.xlu0 %205
  %209 = vset.pattern.permute.xlu0 0
  %210 = vperm.xlu0 %209, %v176
  %v211 = vpop.permute.xlu0 %210
  %214 = vset.pattern.permute.xlu0 0
  %215 = vperm.xlu0 %214, %v177
  %v216 = vpop.permute.xlu0 %215
  %v218 = vmul.f32 %v74, %v181
  %v219 = vmul.f32 %v75, %v181
  %v220 = vmul.f32 %v76, %v186
  %v221 = vmul.f32 %v77, %v186
  %v222 = vmul.f32 %v78, %v191
  %v223 = vmul.f32 %v79, %v191
  %v224 = vmul.f32 %v80, %v196
  %v225 = vmul.f32 %v81, %v196
  %v226 = vmul.f32 %v82, %v201
  %v227 = vmul.f32 %v83, %v201
  %v228 = vmul.f32 %v84, %v206
  %v229 = vmul.f32 %v85, %v206
  %v230 = vmul.f32 %v86, %v211
  %v231 = vmul.f32 %v87, %v211
  %v232 = vmul.f32 %v88, %v216
  %v233 = vmul.f32 %v89, %v216
  %v234 = vld [vmem:[%s2] sm:$0xff]
  %v235 = vld [vmem:[%s2 + $0x8] sm:$0xff]
  %v236 = vld [vmem:[%s2 + $0x10] sm:$0xff]
  %v237 = vld [vmem:[%s2 + $0x18] sm:$0xff]
  %v238 = vld [vmem:[%s2 + $0x20] sm:$0xff]
  %v239 = vld [vmem:[%s2 + $0x28] sm:$0xff]
  %v240 = vld [vmem:[%s2 + $0x30] sm:$0xff]
  %v241 = vld [vmem:[%s2 + $0x38] sm:$0xff]
  %243 = vset.pattern.permute.xlu0 0
  %244 = vperm.xlu0 %243, %v234
  %v245 = vpop.permute.xlu0 %244
  %248 = vset.pattern.permute.xlu0 0
  %249 = vperm.xlu0 %248, %v235
  %v250 = vpop.permute.xlu0 %249
  %253 = vset.pattern.permute.xlu0 0
  %254 = vperm.xlu0 %253, %v236
  %v255 = vpop.permute.xlu0 %254
  %258 = vset.pattern.permute.xlu0 0
  %259 = vperm.xlu0 %258, %v237
  %v260 = vpop.permute.xlu0 %259
  %263 = vset.pattern.permute.xlu0 0
  %264 = vperm.xlu0 %263, %v238
  %v265 = vpop.permute.xlu0 %264
  %268 = vset.pattern.permute.xlu0 0
  %269 = vperm.xlu0 %268, %v239
  %v270 = vpop.permute.xlu0 %269
  %273 = vset.pattern.permute.xlu0 0
  %274 = vperm.xlu0 %273, %v240
  %v275 = vpop.permute.xlu0 %274
  %278 = vset.pattern.permute.xlu0 0
  %279 = vperm.xlu0 %278, %v241
  %v280 = vpop.permute.xlu0 %279
  %v282 = vadd.f32 %v218, %v245
  %v283 = vadd.f32 %v219, %v245
  %v284 = vadd.f32 %v220, %v250
  %v285 = vadd.f32 %v221, %v250
  %v286 = vadd.f32 %v222, %v255
  %v287 = vadd.f32 %v223, %v255
  %v288 = vadd.f32 %v224, %v260
  %v289 = vadd.f32 %v225, %v260
  %v290 = vadd.f32 %v226, %v265
  %v291 = vadd.f32 %v227, %v265
  %v292 = vadd.f32 %v228, %v270
  %v293 = vadd.f32 %v229, %v270
  %v294 = vadd.f32 %v230, %v275
  %v295 = vadd.f32 %v231, %v275
  %v296 = vadd.f32 %v232, %v280
  %v297 = vadd.f32 %v233, %v280
  %v298 = vmax.f32 %v282, 0.0
  %v299 = vmax.f32 %v283, 0.0
  %v300 = vmax.f32 %v284, 0.0
  %v301 = vmax.f32 %v285, 0.0
  %v302 = vmax.f32 %v286, 0.0
  %v303 = vmax.f32 %v287, 0.0
  %v304 = vmax.f32 %v288, 0.0
  %v305 = vmax.f32 %v289, 0.0
  %v306 = vmax.f32 %v290, 0.0
  %v307 = vmax.f32 %v291, 0.0
  %v308 = vmax.f32 %v292, 0.0
  %v309 = vmax.f32 %v293, 0.0
  %v310 = vmax.f32 %v294, 0.0
  %v311 = vmax.f32 %v295, 0.0
  %v312 = vmax.f32 %v296, 0.0
  %v313 = vmax.f32 %v297, 0.0
  %s314 = smul.addr %s14, 8
  %s315 = scalar_lea.vmem %s3, %s314
  %316 = vst [vmem:[%s315] sm:$0xff] %v298
  %317 = vst.msk [vmem:[%s315 + $0x8] sm:$0xff] %vm33, %v299
  %318 = vst [vmem:[%s315 + $0x10] sm:$0xff] %v300
  %319 = vst.msk [vmem:[%s315 + $0x18] sm:$0xff] %vm33, %v301
  %320 = vst [vmem:[%s315 + $0x20] sm:$0xff] %v302
  %321 = vst.msk [vmem:[%s315 + $0x28] sm:$0xff] %vm33, %v303
  %322 = vst [vmem:[%s315 + $0x30] sm:$0xff] %v304
  %323 = vst.msk [vmem:[%s315 + $0x38] sm:$0xff] %vm33, %v305
  %324 = vst [vmem:[%s315 + $0x40] sm:$0xff] %v306
  %325 = vst.msk [vmem:[%s315 + $0x48] sm:$0xff] %vm33, %v307
  %326 = vst [vmem:[%s315 + $0x50] sm:$0xff] %v308
  %327 = vst.msk [vmem:[%s315 + $0x58] sm:$0xff] %vm33, %v309
  %328 = vst [vmem:[%s315 + $0x60] sm:$0xff] %v310
  %329 = vst.msk [vmem:[%s315 + $0x68] sm:$0xff] %vm33, %v311
  %330 = vst [vmem:[%s315 + $0x70] sm:$0xff] %v312
  %331 = vst.msk [vmem:[%s315 + $0x78] sm:$0xff] %vm33, %v313
  %s332 = smul.u32 8, 2
  %s333 = smul.addr %s332, 8
  %s334 = scalar_lea.vmem %s0, %s333
  %v335 = vld [vmem:[%s334] sm:$0xff]
  %v336 = vld [vmem:[%s334 + $0x8] sm:$0xff]
  %v337 = vld [vmem:[%s334 + $0x10] sm:$0xff]
  %v338 = vld [vmem:[%s334 + $0x18] sm:$0xff]
  %v339 = vld [vmem:[%s334 + $0x20] sm:$0xff]
  %v340 = vld [vmem:[%s334 + $0x28] sm:$0xff]
  %v341 = vld [vmem:[%s334 + $0x30] sm:$0xff]
  %v342 = vld [vmem:[%s334 + $0x38] sm:$0xff]
  %v343 = vld [vmem:[%s334 + $0x40] sm:$0xff]
  %v344 = vld [vmem:[%s334 + $0x48] sm:$0xff]
  %v345 = vld [vmem:[%s334 + $0x50] sm:$0xff]
  %v346 = vld [vmem:[%s334 + $0x58] sm:$0xff]
  %v347 = vld [vmem:[%s334 + $0x60] sm:$0xff]
  %v348 = vld [vmem:[%s334 + $0x68] sm:$0xff]
  %v349 = vld [vmem:[%s334 + $0x70] sm:$0xff]
  %v350 = vld [vmem:[%s334 + $0x78] sm:$0xff]
  %v351 = vsel %vm33, %v336, 0.0
  %v352 = vadd.f32 %v335, %v351
  %353 = vadd.xlane.f32.xlu0 %v352
  %v354 = vpop.xlane.xlu0 %353
  %v355 = vsel %vm33, %v338, 0.0
  %v356 = vadd.f32 %v337, %v355
  %357 = vadd.xlane.f32.xlu0 %v356
  %v358 = vpop.xlane.xlu0 %357
  %v359 = vsel %vm33, %v340, 0.0
  %v360 = vadd.f32 %v339, %v359
  %361 = vadd.xlane.f32.xlu0 %v360
  %v362 = vpop.xlane.xlu0 %361
  %v363 = vsel %vm33, %v342, 0.0
  %v364 = vadd.f32 %v341, %v363
  %365 = vadd.xlane.f32.xlu0 %v364
  %v366 = vpop.xlane.xlu0 %365
  %v367 = vsel %vm33, %v344, 0.0
  %v368 = vadd.f32 %v343, %v367
  %369 = vadd.xlane.f32.xlu0 %v368
  %v370 = vpop.xlane.xlu0 %369
  %v371 = vsel %vm33, %v346, 0.0
  %v372 = vadd.f32 %v345, %v371
  %373 = vadd.xlane.f32.xlu0 %v372
  %v374 = vpop.xlane.xlu0 %373
  %v375 = vsel %vm33, %v348, 0.0
  %v376 = vadd.f32 %v347, %v375
  %377 = vadd.xlane.f32.xlu0 %v376
  %v378 = vpop.xlane.xlu0 %377
  %v379 = vsel %vm33, %v350, 0.0
  %v380 = vadd.f32 %v349, %v379
  %381 = vadd.xlane.f32.xlu0 %v380
  %v382 = vpop.xlane.xlu0 %381
  %v383 = vmul.f32 %v354, 0.0051020407
  %v384 = vmul.f32 %v358, 0.0051020407
  %v385 = vmul.f32 %v362, 0.0051020407
  %v386 = vmul.f32 %v366, 0.0051020407
  %v387 = vmul.f32 %v370, 0.0051020407
  %v388 = vmul.f32 %v374, 0.0051020407
  %v389 = vmul.f32 %v378, 0.0051020407
  %v390 = vmul.f32 %v382, 0.0051020407
  %v391 = vsub.f32 %v335, %v383
  %v392 = vsub.f32 %v336, %v383
  %v393 = vsub.f32 %v337, %v384
  %v394 = vsub.f32 %v338, %v384
  %v395 = vsub.f32 %v339, %v385
  %v396 = vsub.f32 %v340, %v385
  %v397 = vsub.f32 %v341, %v386
  %v398 = vsub.f32 %v342, %v386
  %v399 = vsub.f32 %v343, %v387
  %v400 = vsub.f32 %v344, %v387
  %v401 = vsub.f32 %v345, %v388
  %v402 = vsub.f32 %v346, %v388
  %v403 = vsub.f32 %v347, %v389
  %v404 = vsub.f32 %v348, %v389
  %v405 = vsub.f32 %v349, %v390
  %v406 = vsub.f32 %v350, %v390
  %v407 = vmul.f32 %v391, %v391
  %v408 = vmul.f32 %v392, %v392
  %v409 = vmul.f32 %v393, %v393
  %v410 = vmul.f32 %v394, %v394
  %v411 = vmul.f32 %v395, %v395
  %v412 = vmul.f32 %v396, %v396
  %v413 = vmul.f32 %v397, %v397
  %v414 = vmul.f32 %v398, %v398
  %v415 = vmul.f32 %v399, %v399
  %v416 = vmul.f32 %v400, %v400
  %v417 = vmul.f32 %v401, %v401
  %v418 = vmul.f32 %v402, %v402
  %v419 = vmul.f32 %v403, %v403
  %v420 = vmul.f32 %v404, %v404
  %v421 = vmul.f32 %v405, %v405
  %v422 = vmul.f32 %v406, %v406
  %v423 = vsel %vm33, %v408, 0.0
  %v424 = vadd.f32 %v407, %v423
  %425 = vadd.xlane.f32.xlu0 %v424
  %v426 = vpop.xlane.xlu0 %425
  %v427 = vsel %vm33, %v410, 0.0
  %v428 = vadd.f32 %v409, %v427
  %429 = vadd.xlane.f32.xlu0 %v428
  %v430 = vpop.xlane.xlu0 %429
  %v431 = vsel %vm33, %v412, 0.0
  %v432 = vadd.f32 %v411, %v431
  %433 = vadd.xlane.f32.xlu0 %v432
  %v434 = vpop.xlane.xlu0 %433
  %v435 = vsel %vm33, %v414, 0.0
  %v436 = vadd.f32 %v413, %v435
  %437 = vadd.xlane.f32.xlu0 %v436
  %v438 = vpop.xlane.xlu0 %437
  %v439 = vsel %vm33, %v416, 0.0
  %v440 = vadd.f32 %v415, %v439
  %441 = vadd.xlane.f32.xlu0 %v440
  %v442 = vpop.xlane.xlu0 %441
  %v443 = vsel %vm33, %v418, 0.0
  %v444 = vadd.f32 %v417, %v443
  %445 = vadd.xlane.f32.xlu0 %v444
  %v446 = vpop.xlane.xlu0 %445
  %v447 = vsel %vm33, %v420, 0.0
  %v448 = vadd.f32 %v419, %v447
  %449 = vadd.xlane.f32.xlu0 %v448
  %v450 = vpop.xlane.xlu0 %449
  %v451 = vsel %vm33, %v422, 0.0
  %v452 = vadd.f32 %v421, %v451
  %453 = vadd.xlane.f32.xlu0 %v452
  %v454 = vpop.xlane.xlu0 %453
  %v455 = vmul.f32 %v426, 0.0051020407
  %v456 = vmul.f32 %v430, 0.0051020407
  %v457 = vmul.f32 %v434, 0.0051020407
  %v458 = vmul.f32 %v438, 0.0051020407
  %v459 = vmul.f32 %v442, 0.0051020407
  %v460 = vmul.f32 %v446, 0.0051020407
  %v461 = vmul.f32 %v450, 0.0051020407
  %v462 = vmul.f32 %v454, 0.0051020407
  %v463 = vadd.f32 %v455, 1e-05
  %v464 = vadd.f32 %v456, 1e-05
  %v465 = vadd.f32 %v457, 1e-05
  %v466 = vadd.f32 %v458, 1e-05
  %v467 = vadd.f32 %v459, 1e-05
  %v468 = vadd.f32 %v460, 1e-05
  %v469 = vadd.f32 %v461, 1e-05
  %v470 = vadd.f32 %v462, 1e-05
  %v471 = vrsqrt.pop %v463
  %v472 = vrsqrt.pop %v464
  %v473 = vrsqrt.pop %v465
  %v474 = vrsqrt.pop %v466
  %v475 = vrsqrt.pop %v467
  %v476 = vrsqrt.pop %v468
  %v477 = vrsqrt.pop %v469
  %v478 = vrsqrt.pop %v470
  %s479 = scalar_lea.vmem %s1, 64
  %v480 = vld [vmem:[%s479] sm:$0xff]
  %v481 = vld [vmem:[%s479 + $0x8] sm:$0xff]
  %v482 = vld [vmem:[%s479 + $0x10] sm:$0xff]
  %v483 = vld [vmem:[%s479 + $0x18] sm:$0xff]
  %v484 = vld [vmem:[%s479 + $0x20] sm:$0xff]
  %v485 = vld [vmem:[%s479 + $0x28] sm:$0xff]
  %v486 = vld [vmem:[%s479 + $0x30] sm:$0xff]
  %v487 = vld [vmem:[%s479 + $0x38] sm:$0xff]
  %v488 = vmul.f32 %v471, %v480
  %v489 = vmul.f32 %v472, %v481
  %v490 = vmul.f32 %v473, %v482
  %v491 = vmul.f32 %v474, %v483
  %v492 = vmul.f32 %v475, %v484
  %v493 = vmul.f32 %v476, %v485
  %v494 = vmul.f32 %v477, %v486
  %v495 = vmul.f32 %v478, %v487
  %497 = vset.pattern.permute.xlu0 0
  %498 = vperm.xlu0 %497, %v488
  %v499 = vpop.permute.xlu0 %498
  %502 = vset.pattern.permute.xlu0 0
  %503 = vperm.xlu0 %502, %v489
  %v504 = vpop.permute.xlu0 %503
  %507 = vset.pattern.permute.xlu0 0
  %508 = vperm.xlu0 %507, %v490
  %v509 = vpop.permute.xlu0 %508
  %512 = vset.pattern.permute.xlu0 0
  %513 = vperm.xlu0 %512, %v491
  %v514 = vpop.permute.xlu0 %513
  %517 = vset.pattern.permute.xlu0 0
  %518 = vperm.xlu0 %517, %v492
  %v519 = vpop.permute.xlu0 %518
  %522 = vset.pattern.permute.xlu0 0
  %523 = vperm.xlu0 %522, %v493
  %v524 = vpop.permute.xlu0 %523
  %527 = vset.pattern.permute.xlu0 0
  %528 = vperm.xlu0 %527, %v494
  %v529 = vpop.permute.xlu0 %528
  %532 = vset.pattern.permute.xlu0 0
  %533 = vperm.xlu0 %532, %v495
  %v534 = vpop.permute.xlu0 %533
  %v536 = vmul.f32 %v391, %v499
  %v537 = vmul.f32 %v392, %v499
  %v538 = vmul.f32 %v393, %v504
  %v539 = vmul.f32 %v394, %v504
  %v540 = vmul.f32 %v395, %v509
  %v541 = vmul.f32 %v396, %v509
  %v542 = vmul.f32 %v397, %v514
  %v543 = vmul.f32 %v398, %v514
  %v544 = vmul.f32 %v399, %v519
  %v545 = vmul.f32 %v400, %v519
  %v546 = vmul.f32 %v401, %v524
  %v547 = vmul.f32 %v402, %v524
  %v548 = vmul.f32 %v403, %v529
  %v549 = vmul.f32 %v404, %v529
  %v550 = vmul.f32 %v405, %v534
  %v551 = vmul.f32 %v406, %v534
  %s552 = scalar_lea.vmem %s2, 64
  %v553 = vld [vmem:[%s552] sm:$0xff]
  %v554 = vld [vmem:[%s552 + $0x8] sm:$0xff]
  %v555 = vld [vmem:[%s552 + $0x10] sm:$0xff]
  %v556 = vld [vmem:[%s552 + $0x18] sm:$0xff]
  %v557 = vld [vmem:[%s552 + $0x20] sm:$0xff]
  %v558 = vld [vmem:[%s552 + $0x28] sm:$0xff]
  %v559 = vld [vmem:[%s552 + $0x30] sm:$0xff]
  %v560 = vld [vmem:[%s552 + $0x38] sm:$0xff]
  %562 = vset.pattern.permute.xlu0 0
  %563 = vperm.xlu0 %562, %v553
  %v564 = vpop.permute.xlu0 %563
  %567 = vset.pattern.permute.xlu0 0
  %568 = vperm.xlu0 %567, %v554
  %v569 = vpop.permute.xlu0 %568
  %572 = vset.pattern.permute.xlu0 0
  %573 = vperm.xlu0 %572, %v555
  %v574 = vpop.permute.xlu0 %573
  %577 = vset.pattern.permute.xlu0 0
  %578 = vperm.xlu0 %577, %v556
  %v579 = vpop.permute.xlu0 %578
  %582 = vset.pattern.permute.xlu0 0
  %583 = vperm.xlu0 %582, %v557
  %v584 = vpop.permute.xlu0 %583
  %587 = vset.pattern.permute.xlu0 0
  %588 = vperm.xlu0 %587, %v558
  %v589 = vpop.permute.xlu0 %588
  %592 = vset.pattern.permute.xlu0 0
  %593 = vperm.xlu0 %592, %v559
  %v594 = vpop.permute.xlu0 %593
  %597 = vset.pattern.permute.xlu0 0
  %598 = vperm.xlu0 %597, %v560
  %v599 = vpop.permute.xlu0 %598
  %v601 = vadd.f32 %v536, %v564
  %v602 = vadd.f32 %v537, %v564
  %v603 = vadd.f32 %v538, %v569
  %v604 = vadd.f32 %v539, %v569
  %v605 = vadd.f32 %v540, %v574
  %v606 = vadd.f32 %v541, %v574
  %v607 = vadd.f32 %v542, %v579
  %v608 = vadd.f32 %v543, %v579
  %v609 = vadd.f32 %v544, %v584
  %v610 = vadd.f32 %v545, %v584
  %v611 = vadd.f32 %v546, %v589
  %v612 = vadd.f32 %v547, %v589
  %v613 = vadd.f32 %v548, %v594
  %v614 = vadd.f32 %v549, %v594
  %v615 = vadd.f32 %v550, %v599
  %v616 = vadd.f32 %v551, %v599
  %v617 = vmax.f32 %v601, 0.0
  %v618 = vmax.f32 %v602, 0.0
  %v619 = vmax.f32 %v603, 0.0
  %v620 = vmax.f32 %v604, 0.0
  %v621 = vmax.f32 %v605, 0.0
  %v622 = vmax.f32 %v606, 0.0
  %v623 = vmax.f32 %v607, 0.0
  %v624 = vmax.f32 %v608, 0.0
  %v625 = vmax.f32 %v609, 0.0
  %v626 = vmax.f32 %v610, 0.0
  %v627 = vmax.f32 %v611, 0.0
  %v628 = vmax.f32 %v612, 0.0
  %v629 = vmax.f32 %v613, 0.0
  %v630 = vmax.f32 %v614, 0.0
  %v631 = vmax.f32 %v615, 0.0
  %v632 = vmax.f32 %v616, 0.0
  %s633 = smul.addr %s332, 8
  %s634 = scalar_lea.vmem %s3, %s633
  %635 = vst [vmem:[%s634] sm:$0xff] %v617
  %636 = vst.msk [vmem:[%s634 + $0x8] sm:$0xff] %vm33, %v618
  %637 = vst [vmem:[%s634 + $0x10] sm:$0xff] %v619
  %638 = vst.msk [vmem:[%s634 + $0x18] sm:$0xff] %vm33, %v620
  %639 = vst [vmem:[%s634 + $0x20] sm:$0xff] %v621
  %640 = vst.msk [vmem:[%s634 + $0x28] sm:$0xff] %vm33, %v622
  %641 = vst [vmem:[%s634 + $0x30] sm:$0xff] %v623
  %642 = vst.msk [vmem:[%s634 + $0x38] sm:$0xff] %vm33, %v624
  %643 = vst [vmem:[%s634 + $0x40] sm:$0xff] %v625
  %644 = vst.msk [vmem:[%s634 + $0x48] sm:$0xff] %vm33, %v626
  %645 = vst [vmem:[%s634 + $0x50] sm:$0xff] %v627
  %646 = vst.msk [vmem:[%s634 + $0x58] sm:$0xff] %vm33, %v628
  %647 = vst [vmem:[%s634 + $0x60] sm:$0xff] %v629
  %648 = vst.msk [vmem:[%s634 + $0x68] sm:$0xff] %vm33, %v630
  %649 = vst [vmem:[%s634 + $0x70] sm:$0xff] %v631
  %650 = vst.msk [vmem:[%s634 + $0x78] sm:$0xff] %vm33, %v632
  %s651 = smul.u32 16, 2
  %s652 = smul.addr %s651, 8
  %s653 = scalar_lea.vmem %s0, %s652
  %v654 = vld [vmem:[%s653] sm:$0xff]
  %v655 = vld [vmem:[%s653 + $0x8] sm:$0xff]
  %v656 = vld [vmem:[%s653 + $0x10] sm:$0xff]
  %v657 = vld [vmem:[%s653 + $0x18] sm:$0xff]
  %v658 = vld [vmem:[%s653 + $0x20] sm:$0xff]
  %v659 = vld [vmem:[%s653 + $0x28] sm:$0xff]
  %v660 = vld [vmem:[%s653 + $0x30] sm:$0xff]
  %v661 = vld [vmem:[%s653 + $0x38] sm:$0xff]
  %v662 = vld [vmem:[%s653 + $0x40] sm:$0xff]
  %v663 = vld [vmem:[%s653 + $0x48] sm:$0xff]
  %v664 = vld [vmem:[%s653 + $0x50] sm:$0xff]
  %v665 = vld [vmem:[%s653 + $0x58] sm:$0xff]
  %v666 = vld [vmem:[%s653 + $0x60] sm:$0xff]
  %v667 = vld [vmem:[%s653 + $0x68] sm:$0xff]
  %v668 = vld [vmem:[%s653 + $0x70] sm:$0xff]
  %v669 = vld [vmem:[%s653 + $0x78] sm:$0xff]
  %v670 = vsel %vm33, %v655, 0.0
  %v671 = vadd.f32 %v654, %v670
  %672 = vadd.xlane.f32.xlu0 %v671
  %v673 = vpop.xlane.xlu0 %672
  %v674 = vsel %vm33, %v657, 0.0
  %v675 = vadd.f32 %v656, %v674
  %676 = vadd.xlane.f32.xlu0 %v675
  %v677 = vpop.xlane.xlu0 %676
  %v678 = vsel %vm33, %v659, 0.0
  %v679 = vadd.f32 %v658, %v678
  %680 = vadd.xlane.f32.xlu0 %v679
  %v681 = vpop.xlane.xlu0 %680
  %v682 = vsel %vm33, %v661, 0.0
  %v683 = vadd.f32 %v660, %v682
  %684 = vadd.xlane.f32.xlu0 %v683
  %v685 = vpop.xlane.xlu0 %684
  %v686 = vsel %vm33, %v663, 0.0
  %v687 = vadd.f32 %v662, %v686
  %688 = vadd.xlane.f32.xlu0 %v687
  %v689 = vpop.xlane.xlu0 %688
  %v690 = vsel %vm33, %v665, 0.0
  %v691 = vadd.f32 %v664, %v690
  %692 = vadd.xlane.f32.xlu0 %v691
  %v693 = vpop.xlane.xlu0 %692
  %v694 = vsel %vm33, %v667, 0.0
  %v695 = vadd.f32 %v666, %v694
  %696 = vadd.xlane.f32.xlu0 %v695
  %v697 = vpop.xlane.xlu0 %696
  %v698 = vsel %vm33, %v669, 0.0
  %v699 = vadd.f32 %v668, %v698
  %700 = vadd.xlane.f32.xlu0 %v699
  %v701 = vpop.xlane.xlu0 %700
  %v702 = vmul.f32 %v673, 0.0051020407
  %v703 = vmul.f32 %v677, 0.0051020407
  %v704 = vmul.f32 %v681, 0.0051020407
  %v705 = vmul.f32 %v685, 0.0051020407
  %v706 = vmul.f32 %v689, 0.0051020407
  %v707 = vmul.f32 %v693, 0.0051020407
  %v708 = vmul.f32 %v697, 0.0051020407
  %v709 = vmul.f32 %v701, 0.0051020407
  %v710 = vsub.f32 %v654, %v702
  %v711 = vsub.f32 %v655, %v702
  %v712 = vsub.f32 %v656, %v703
  %v713 = vsub.f32 %v657, %v703
  %v714 = vsub.f32 %v658, %v704
  %v715 = vsub.f32 %v659, %v704
  %v716 = vsub.f32 %v660, %v705
  %v717 = vsub.f32 %v661, %v705
  %v718 = vsub.f32 %v662, %v706
  %v719 = vsub.f32 %v663, %v706
  %v720 = vsub.f32 %v664, %v707
  %v721 = vsub.f32 %v665, %v707
  %v722 = vsub.f32 %v666, %v708
  %v723 = vsub.f32 %v667, %v708
  %v724 = vsub.f32 %v668, %v709
  %v725 = vsub.f32 %v669, %v709
  %v726 = vmul.f32 %v710, %v710
  %v727 = vmul.f32 %v711, %v711
  %v728 = vmul.f32 %v712, %v712
  %v729 = vmul.f32 %v713, %v713
  %v730 = vmul.f32 %v714, %v714
  %v731 = vmul.f32 %v715, %v715
  %v732 = vmul.f32 %v716, %v716
  %v733 = vmul.f32 %v717, %v717
  %v734 = vmul.f32 %v718, %v718
  %v735 = vmul.f32 %v719, %v719
  %v736 = vmul.f32 %v720, %v720
  %v737 = vmul.f32 %v721, %v721
  %v738 = vmul.f32 %v722, %v722
  %v739 = vmul.f32 %v723, %v723
  %v740 = vmul.f32 %v724, %v724
  %v741 = vmul.f32 %v725, %v725
  %v742 = vsel %vm33, %v727, 0.0
  %v743 = vadd.f32 %v726, %v742
  %744 = vadd.xlane.f32.xlu0 %v743
  %v745 = vpop.xlane.xlu0 %744
  %v746 = vsel %vm33, %v729, 0.0
  %v747 = vadd.f32 %v728, %v746
  %748 = vadd.xlane.f32.xlu0 %v747
  %v749 = vpop.xlane.xlu0 %748
  %v750 = vsel %vm33, %v731, 0.0
  %v751 = vadd.f32 %v730, %v750
  %752 = vadd.xlane.f32.xlu0 %v751
  %v753 = vpop.xlane.xlu0 %752
  %v754 = vsel %vm33, %v733, 0.0
  %v755 = vadd.f32 %v732, %v754
  %756 = vadd.xlane.f32.xlu0 %v755
  %v757 = vpop.xlane.xlu0 %756
  %v758 = vsel %vm33, %v735, 0.0
  %v759 = vadd.f32 %v734, %v758
  %760 = vadd.xlane.f32.xlu0 %v759
  %v761 = vpop.xlane.xlu0 %760
  %v762 = vsel %vm33, %v737, 0.0
  %v763 = vadd.f32 %v736, %v762
  %764 = vadd.xlane.f32.xlu0 %v763
  %v765 = vpop.xlane.xlu0 %764
  %v766 = vsel %vm33, %v739, 0.0
  %v767 = vadd.f32 %v738, %v766
  %768 = vadd.xlane.f32.xlu0 %v767
  %v769 = vpop.xlane.xlu0 %768
  %v770 = vsel %vm33, %v741, 0.0
  %v771 = vadd.f32 %v740, %v770
  %772 = vadd.xlane.f32.xlu0 %v771
  %v773 = vpop.xlane.xlu0 %772
  %v774 = vmul.f32 %v745, 0.0051020407
  %v775 = vmul.f32 %v749, 0.0051020407
  %v776 = vmul.f32 %v753, 0.0051020407
  %v777 = vmul.f32 %v757, 0.0051020407
  %v778 = vmul.f32 %v761, 0.0051020407
  %v779 = vmul.f32 %v765, 0.0051020407
  %v780 = vmul.f32 %v769, 0.0051020407
  %v781 = vmul.f32 %v773, 0.0051020407
  %v782 = vadd.f32 %v774, 1e-05
  %v783 = vadd.f32 %v775, 1e-05
  %v784 = vadd.f32 %v776, 1e-05
  %v785 = vadd.f32 %v777, 1e-05
  %v786 = vadd.f32 %v778, 1e-05
  %v787 = vadd.f32 %v779, 1e-05
  %v788 = vadd.f32 %v780, 1e-05
  %v789 = vadd.f32 %v781, 1e-05
  %v790 = vrsqrt.pop %v782
  %v791 = vrsqrt.pop %v783
  %v792 = vrsqrt.pop %v784
  %v793 = vrsqrt.pop %v785
  %v794 = vrsqrt.pop %v786
  %v795 = vrsqrt.pop %v787
  %v796 = vrsqrt.pop %v788
  %v797 = vrsqrt.pop %v789
  %s798 = scalar_lea.vmem %s1, 128
  %v799 = vld [vmem:[%s798] sm:$0xff]
  %v800 = vld [vmem:[%s798 + $0x8] sm:$0xff]
  %v801 = vld [vmem:[%s798 + $0x10] sm:$0xff]
  %v802 = vld [vmem:[%s798 + $0x18] sm:$0xff]
  %v803 = vld [vmem:[%s798 + $0x20] sm:$0xff]
  %v804 = vld [vmem:[%s798 + $0x28] sm:$0xff]
  %v805 = vld [vmem:[%s798 + $0x30] sm:$0xff]
  %v806 = vld [vmem:[%s798 + $0x38] sm:$0xff]
  %v807 = vmul.f32 %v790, %v799
  %v808 = vmul.f32 %v791, %v800
  %v809 = vmul.f32 %v792, %v801
  %v810 = vmul.f32 %v793, %v802
  %v811 = vmul.f32 %v794, %v803
  %v812 = vmul.f32 %v795, %v804
  %v813 = vmul.f32 %v796, %v805
  %v814 = vmul.f32 %v797, %v806
  %816 = vset.pattern.permute.xlu0 0
  %817 = vperm.xlu0 %816, %v807
  %v818 = vpop.permute.xlu0 %817
  %821 = vset.pattern.permute.xlu0 0
  %822 = vperm.xlu0 %821, %v808
  %v823 = vpop.permute.xlu0 %822
  %826 = vset.pattern.permute.xlu0 0
  %827 = vperm.xlu0 %826, %v809
  %v828 = vpop.permute.xlu0 %827
  %831 = vset.pattern.permute.xlu0 0
  %832 = vperm.xlu0 %831, %v810
  %v833 = vpop.permute.xlu0 %832
  %836 = vset.pattern.permute.xlu0 0
  %837 = vperm.xlu0 %836, %v811
  %v838 = vpop.permute.xlu0 %837
  %841 = vset.pattern.permute.xlu0 0
  %842 = vperm.xlu0 %841, %v812
  %v843 = vpop.permute.xlu0 %842
  %846 = vset.pattern.permute.xlu0 0
  %847 = vperm.xlu0 %846, %v813
  %v848 = vpop.permute.xlu0 %847
  %851 = vset.pattern.permute.xlu0 0
  %852 = vperm.xlu0 %851, %v814
  %v853 = vpop.permute.xlu0 %852
  %v855 = vmul.f32 %v710, %v818
  %v856 = vmul.f32 %v711, %v818
  %v857 = vmul.f32 %v712, %v823
  %v858 = vmul.f32 %v713, %v823
  %v859 = vmul.f32 %v714, %v828
  %v860 = vmul.f32 %v715, %v828
  %v861 = vmul.f32 %v716, %v833
  %v862 = vmul.f32 %v717, %v833
  %v863 = vmul.f32 %v718, %v838
  %v864 = vmul.f32 %v719, %v838
  %v865 = vmul.f32 %v720, %v843
  %v866 = vmul.f32 %v721, %v843
  %v867 = vmul.f32 %v722, %v848
  %v868 = vmul.f32 %v723, %v848
  %v869 = vmul.f32 %v724, %v853
  %v870 = vmul.f32 %v725, %v853
  %s871 = scalar_lea.vmem %s2, 128
  %v872 = vld [vmem:[%s871] sm:$0xff]
  %v873 = vld [vmem:[%s871 + $0x8] sm:$0xff]
  %v874 = vld [vmem:[%s871 + $0x10] sm:$0xff]
  %v875 = vld [vmem:[%s871 + $0x18] sm:$0xff]
  %v876 = vld [vmem:[%s871 + $0x20] sm:$0xff]
  %v877 = vld [vmem:[%s871 + $0x28] sm:$0xff]
  %v878 = vld [vmem:[%s871 + $0x30] sm:$0xff]
  %v879 = vld [vmem:[%s871 + $0x38] sm:$0xff]
  %881 = vset.pattern.permute.xlu0 0
  %882 = vperm.xlu0 %881, %v872
  %v883 = vpop.permute.xlu0 %882
  %886 = vset.pattern.permute.xlu0 0
  %887 = vperm.xlu0 %886, %v873
  %v888 = vpop.permute.xlu0 %887
  %891 = vset.pattern.permute.xlu0 0
  %892 = vperm.xlu0 %891, %v874
  %v893 = vpop.permute.xlu0 %892
  %896 = vset.pattern.permute.xlu0 0
  %897 = vperm.xlu0 %896, %v875
  %v898 = vpop.permute.xlu0 %897
  %901 = vset.pattern.permute.xlu0 0
  %902 = vperm.xlu0 %901, %v876
  %v903 = vpop.permute.xlu0 %902
  %906 = vset.pattern.permute.xlu0 0
  %907 = vperm.xlu0 %906, %v877
  %v908 = vpop.permute.xlu0 %907
  %911 = vset.pattern.permute.xlu0 0
  %912 = vperm.xlu0 %911, %v878
  %v913 = vpop.permute.xlu0 %912
  %916 = vset.pattern.permute.xlu0 0
  %917 = vperm.xlu0 %916, %v879
  %v918 = vpop.permute.xlu0 %917
  %v920 = vadd.f32 %v855, %v883
  %v921 = vadd.f32 %v856, %v883
  %v922 = vadd.f32 %v857, %v888
  %v923 = vadd.f32 %v858, %v888
  %v924 = vadd.f32 %v859, %v893
  %v925 = vadd.f32 %v860, %v893
  %v926 = vadd.f32 %v861, %v898
  %v927 = vadd.f32 %v862, %v898
  %v928 = vadd.f32 %v863, %v903
  %v929 = vadd.f32 %v864, %v903
  %v930 = vadd.f32 %v865, %v908
  %v931 = vadd.f32 %v866, %v908
  %v932 = vadd.f32 %v867, %v913
  %v933 = vadd.f32 %v868, %v913
  %v934 = vadd.f32 %v869, %v918
  %v935 = vadd.f32 %v870, %v918
  %v936 = vmax.f32 %v920, 0.0
  %v937 = vmax.f32 %v921, 0.0
  %v938 = vmax.f32 %v922, 0.0
  %v939 = vmax.f32 %v923, 0.0
  %v940 = vmax.f32 %v924, 0.0
  %v941 = vmax.f32 %v925, 0.0
  %v942 = vmax.f32 %v926, 0.0
  %v943 = vmax.f32 %v927, 0.0
  %v944 = vmax.f32 %v928, 0.0
  %v945 = vmax.f32 %v929, 0.0
  %v946 = vmax.f32 %v930, 0.0
  %v947 = vmax.f32 %v931, 0.0
  %v948 = vmax.f32 %v932, 0.0
  %v949 = vmax.f32 %v933, 0.0
  %v950 = vmax.f32 %v934, 0.0
  %v951 = vmax.f32 %v935, 0.0
  %s952 = smul.addr %s651, 8
  %s953 = scalar_lea.vmem %s3, %s952
  %954 = vst [vmem:[%s953] sm:$0xff] %v936
  %955 = vst.msk [vmem:[%s953 + $0x8] sm:$0xff] %vm33, %v937
  %956 = vst [vmem:[%s953 + $0x10] sm:$0xff] %v938
  %957 = vst.msk [vmem:[%s953 + $0x18] sm:$0xff] %vm33, %v939
  %958 = vst [vmem:[%s953 + $0x20] sm:$0xff] %v940
  %959 = vst.msk [vmem:[%s953 + $0x28] sm:$0xff] %vm33, %v941
  %960 = vst [vmem:[%s953 + $0x30] sm:$0xff] %v942
  %961 = vst.msk [vmem:[%s953 + $0x38] sm:$0xff] %vm33, %v943
  %962 = vst [vmem:[%s953 + $0x40] sm:$0xff] %v944
  %963 = vst.msk [vmem:[%s953 + $0x48] sm:$0xff] %vm33, %v945
  %964 = vst [vmem:[%s953 + $0x50] sm:$0xff] %v946
  %965 = vst.msk [vmem:[%s953 + $0x58] sm:$0xff] %vm33, %v947
  %966 = vst [vmem:[%s953 + $0x60] sm:$0xff] %v948
  %967 = vst.msk [vmem:[%s953 + $0x68] sm:$0xff] %vm33, %v949
  %968 = vst [vmem:[%s953 + $0x70] sm:$0xff] %v950
  %969 = vst.msk [vmem:[%s953 + $0x78] sm:$0xff] %vm33, %v951
  %s970 = smul.u32 24, 2
  %s971 = smul.addr %s970, 8
  %s972 = scalar_lea.vmem %s0, %s971
  %v973 = vld [vmem:[%s972] sm:$0xff]
  %v974 = vld [vmem:[%s972 + $0x8] sm:$0xff]
  %v975 = vld [vmem:[%s972 + $0x10] sm:$0xff]
  %v976 = vld [vmem:[%s972 + $0x18] sm:$0xff]
  %v977 = vld [vmem:[%s972 + $0x20] sm:$0xff]
  %v978 = vld [vmem:[%s972 + $0x28] sm:$0xff]
  %v979 = vld [vmem:[%s972 + $0x30] sm:$0xff]
  %v980 = vld [vmem:[%s972 + $0x38] sm:$0xff]
  %v981 = vld [vmem:[%s972 + $0x40] sm:$0xff]
  %v982 = vld [vmem:[%s972 + $0x48] sm:$0xff]
  %v983 = vld [vmem:[%s972 + $0x50] sm:$0xff]
  %v984 = vld [vmem:[%s972 + $0x58] sm:$0xff]
  %v985 = vld [vmem:[%s972 + $0x60] sm:$0xff]
  %v986 = vld [vmem:[%s972 + $0x68] sm:$0xff]
  %v987 = vld [vmem:[%s972 + $0x70] sm:$0xff]
  %v988 = vld [vmem:[%s972 + $0x78] sm:$0xff]
  %v989 = vsel %vm33, %v974, 0.0
  %v990 = vadd.f32 %v973, %v989
  %991 = vadd.xlane.f32.xlu0 %v990
  %v992 = vpop.xlane.xlu0 %991
  %v993 = vsel %vm33, %v976, 0.0
  %v994 = vadd.f32 %v975, %v993
  %995 = vadd.xlane.f32.xlu0 %v994
  %v996 = vpop.xlane.xlu0 %995
  %v997 = vsel %vm33, %v978, 0.0
  %v998 = vadd.f32 %v977, %v997
  %999 = vadd.xlane.f32.xlu0 %v998
  %v1000 = vpop.xlane.xlu0 %999
  %v1001 = vsel %vm33, %v980, 0.0
  %v1002 = vadd.f32 %v979, %v1001
  %1003 = vadd.xlane.f32.xlu0 %v1002
  %v1004 = vpop.xlane.xlu0 %1003
  %v1005 = vsel %vm33, %v982, 0.0
  %v1006 = vadd.f32 %v981, %v1005
  %1007 = vadd.xlane.f32.xlu0 %v1006
  %v1008 = vpop.xlane.xlu0 %1007
  %v1009 = vsel %vm33, %v984, 0.0
  %v1010 = vadd.f32 %v983, %v1009
  %1011 = vadd.xlane.f32.xlu0 %v1010
  %v1012 = vpop.xlane.xlu0 %1011
  %v1013 = vsel %vm33, %v986, 0.0
  %v1014 = vadd.f32 %v985, %v1013
  %1015 = vadd.xlane.f32.xlu0 %v1014
  %v1016 = vpop.xlane.xlu0 %1015
  %v1017 = vsel %vm33, %v988, 0.0
  %v1018 = vadd.f32 %v987, %v1017
  %1019 = vadd.xlane.f32.xlu0 %v1018
  %v1020 = vpop.xlane.xlu0 %1019
  %v1021 = vmul.f32 %v992, 0.0051020407
  %v1022 = vmul.f32 %v996, 0.0051020407
  %v1023 = vmul.f32 %v1000, 0.0051020407
  %v1024 = vmul.f32 %v1004, 0.0051020407
  %v1025 = vmul.f32 %v1008, 0.0051020407
  %v1026 = vmul.f32 %v1012, 0.0051020407
  %v1027 = vmul.f32 %v1016, 0.0051020407
  %v1028 = vmul.f32 %v1020, 0.0051020407
  %v1029 = vsub.f32 %v973, %v1021
  %v1030 = vsub.f32 %v974, %v1021
  %v1031 = vsub.f32 %v975, %v1022
  %v1032 = vsub.f32 %v976, %v1022
  %v1033 = vsub.f32 %v977, %v1023
  %v1034 = vsub.f32 %v978, %v1023
  %v1035 = vsub.f32 %v979, %v1024
  %v1036 = vsub.f32 %v980, %v1024
  %v1037 = vsub.f32 %v981, %v1025
  %v1038 = vsub.f32 %v982, %v1025
  %v1039 = vsub.f32 %v983, %v1026
  %v1040 = vsub.f32 %v984, %v1026
  %v1041 = vsub.f32 %v985, %v1027
  %v1042 = vsub.f32 %v986, %v1027
  %v1043 = vsub.f32 %v987, %v1028
  %v1044 = vsub.f32 %v988, %v1028
  %v1045 = vmul.f32 %v1029, %v1029
  %v1046 = vmul.f32 %v1030, %v1030
  %v1047 = vmul.f32 %v1031, %v1031
  %v1048 = vmul.f32 %v1032, %v1032
  %v1049 = vmul.f32 %v1033, %v1033
  %v1050 = vmul.f32 %v1034, %v1034
  %v1051 = vmul.f32 %v1035, %v1035
  %v1052 = vmul.f32 %v1036, %v1036
  %v1053 = vmul.f32 %v1037, %v1037
  %v1054 = vmul.f32 %v1038, %v1038
  %v1055 = vmul.f32 %v1039, %v1039
  %v1056 = vmul.f32 %v1040, %v1040
  %v1057 = vmul.f32 %v1041, %v1041
  %v1058 = vmul.f32 %v1042, %v1042
  %v1059 = vmul.f32 %v1043, %v1043
  %v1060 = vmul.f32 %v1044, %v1044
  %v1061 = vsel %vm33, %v1046, 0.0
  %v1062 = vadd.f32 %v1045, %v1061
  %1063 = vadd.xlane.f32.xlu0 %v1062
  %v1064 = vpop.xlane.xlu0 %1063
  %v1065 = vsel %vm33, %v1048, 0.0
  %v1066 = vadd.f32 %v1047, %v1065
  %1067 = vadd.xlane.f32.xlu0 %v1066
  %v1068 = vpop.xlane.xlu0 %1067
  %v1069 = vsel %vm33, %v1050, 0.0
  %v1070 = vadd.f32 %v1049, %v1069
  %1071 = vadd.xlane.f32.xlu0 %v1070
  %v1072 = vpop.xlane.xlu0 %1071
  %v1073 = vsel %vm33, %v1052, 0.0
  %v1074 = vadd.f32 %v1051, %v1073
  %1075 = vadd.xlane.f32.xlu0 %v1074
  %v1076 = vpop.xlane.xlu0 %1075
  %v1077 = vsel %vm33, %v1054, 0.0
  %v1078 = vadd.f32 %v1053, %v1077
  %1079 = vadd.xlane.f32.xlu0 %v1078
  %v1080 = vpop.xlane.xlu0 %1079
  %v1081 = vsel %vm33, %v1056, 0.0
  %v1082 = vadd.f32 %v1055, %v1081
  %1083 = vadd.xlane.f32.xlu0 %v1082
  %v1084 = vpop.xlane.xlu0 %1083
  %v1085 = vsel %vm33, %v1058, 0.0
  %v1086 = vadd.f32 %v1057, %v1085
  %1087 = vadd.xlane.f32.xlu0 %v1086
  %v1088 = vpop.xlane.xlu0 %1087
  %v1089 = vsel %vm33, %v1060, 0.0
  %v1090 = vadd.f32 %v1059, %v1089
  %1091 = vadd.xlane.f32.xlu0 %v1090
  %v1092 = vpop.xlane.xlu0 %1091
  %v1093 = vmul.f32 %v1064, 0.0051020407
  %v1094 = vmul.f32 %v1068, 0.0051020407
  %v1095 = vmul.f32 %v1072, 0.0051020407
  %v1096 = vmul.f32 %v1076, 0.0051020407
  %v1097 = vmul.f32 %v1080, 0.0051020407
  %v1098 = vmul.f32 %v1084, 0.0051020407
  %v1099 = vmul.f32 %v1088, 0.0051020407
  %v1100 = vmul.f32 %v1092, 0.0051020407
  %v1101 = vadd.f32 %v1093, 1e-05
  %v1102 = vadd.f32 %v1094, 1e-05
  %v1103 = vadd.f32 %v1095, 1e-05
  %v1104 = vadd.f32 %v1096, 1e-05
  %v1105 = vadd.f32 %v1097, 1e-05
  %v1106 = vadd.f32 %v1098, 1e-05
  %v1107 = vadd.f32 %v1099, 1e-05
  %v1108 = vadd.f32 %v1100, 1e-05
  %v1109 = vrsqrt.pop %v1101
  %v1110 = vrsqrt.pop %v1102
  %v1111 = vrsqrt.pop %v1103
  %v1112 = vrsqrt.pop %v1104
  %v1113 = vrsqrt.pop %v1105
  %v1114 = vrsqrt.pop %v1106
  %v1115 = vrsqrt.pop %v1107
  %v1116 = vrsqrt.pop %v1108
  %s1117 = scalar_lea.vmem %s1, 192
  %v1118 = vld [vmem:[%s1117] sm:$0xff]
  %v1119 = vld [vmem:[%s1117 + $0x8] sm:$0xff]
  %v1120 = vld [vmem:[%s1117 + $0x10] sm:$0xff]
  %v1121 = vld [vmem:[%s1117 + $0x18] sm:$0xff]
  %v1122 = vld [vmem:[%s1117 + $0x20] sm:$0xff]
  %v1123 = vld [vmem:[%s1117 + $0x28] sm:$0xff]
  %v1124 = vld [vmem:[%s1117 + $0x30] sm:$0xff]
  %v1125 = vld [vmem:[%s1117 + $0x38] sm:$0xff]
  %v1126 = vmul.f32 %v1109, %v1118
  %v1127 = vmul.f32 %v1110, %v1119
  %v1128 = vmul.f32 %v1111, %v1120
  %v1129 = vmul.f32 %v1112, %v1121
  %v1130 = vmul.f32 %v1113, %v1122
  %v1131 = vmul.f32 %v1114, %v1123
  %v1132 = vmul.f32 %v1115, %v1124
  %v1133 = vmul.f32 %v1116, %v1125
  %1135 = vset.pattern.permute.xlu0 0
  %1136 = vperm.xlu0 %1135, %v1126
  %v1137 = vpop.permute.xlu0 %1136
  %1140 = vset.pattern.permute.xlu0 0
  %1141 = vperm.xlu0 %1140, %v1127
  %v1142 = vpop.permute.xlu0 %1141
  %1145 = vset.pattern.permute.xlu0 0
  %1146 = vperm.xlu0 %1145, %v1128
  %v1147 = vpop.permute.xlu0 %1146
  %1150 = vset.pattern.permute.xlu0 0
  %1151 = vperm.xlu0 %1150, %v1129
  %v1152 = vpop.permute.xlu0 %1151
  %1155 = vset.pattern.permute.xlu0 0
  %1156 = vperm.xlu0 %1155, %v1130
  %v1157 = vpop.permute.xlu0 %1156
  %1160 = vset.pattern.permute.xlu0 0
  %1161 = vperm.xlu0 %1160, %v1131
  %v1162 = vpop.permute.xlu0 %1161
  %1165 = vset.pattern.permute.xlu0 0
  %1166 = vperm.xlu0 %1165, %v1132
  %v1167 = vpop.permute.xlu0 %1166
  %1170 = vset.pattern.permute.xlu0 0
  %1171 = vperm.xlu0 %1170, %v1133
  %v1172 = vpop.permute.xlu0 %1171
  %v1174 = vmul.f32 %v1029, %v1137
  %v1175 = vmul.f32 %v1030, %v1137
  %v1176 = vmul.f32 %v1031, %v1142
  %v1177 = vmul.f32 %v1032, %v1142
  %v1178 = vmul.f32 %v1033, %v1147
  %v1179 = vmul.f32 %v1034, %v1147
  %v1180 = vmul.f32 %v1035, %v1152
  %v1181 = vmul.f32 %v1036, %v1152
  %v1182 = vmul.f32 %v1037, %v1157
  %v1183 = vmul.f32 %v1038, %v1157
  %v1184 = vmul.f32 %v1039, %v1162
  %v1185 = vmul.f32 %v1040, %v1162
  %v1186 = vmul.f32 %v1041, %v1167
  %v1187 = vmul.f32 %v1042, %v1167
  %v1188 = vmul.f32 %v1043, %v1172
  %v1189 = vmul.f32 %v1044, %v1172
  %s1190 = scalar_lea.vmem %s2, 192
  %v1191 = vld [vmem:[%s1190] sm:$0xff]
  %v1192 = vld [vmem:[%s1190 + $0x8] sm:$0xff]
  %v1193 = vld [vmem:[%s1190 + $0x10] sm:$0xff]
  %v1194 = vld [vmem:[%s1190 + $0x18] sm:$0xff]
  %v1195 = vld [vmem:[%s1190 + $0x20] sm:$0xff]
  %v1196 = vld [vmem:[%s1190 + $0x28] sm:$0xff]
  %v1197 = vld [vmem:[%s1190 + $0x30] sm:$0xff]
  %v1198 = vld [vmem:[%s1190 + $0x38] sm:$0xff]
  %1200 = vset.pattern.permute.xlu0 0
  %1201 = vperm.xlu0 %1200, %v1191
  %v1202 = vpop.permute.xlu0 %1201
  %1205 = vset.pattern.permute.xlu0 0
  %1206 = vperm.xlu0 %1205, %v1192
  %v1207 = vpop.permute.xlu0 %1206
  %1210 = vset.pattern.permute.xlu0 0
  %1211 = vperm.xlu0 %1210, %v1193
  %v1212 = vpop.permute.xlu0 %1211
  %1215 = vset.pattern.permute.xlu0 0
  %1216 = vperm.xlu0 %1215, %v1194
  %v1217 = vpop.permute.xlu0 %1216
  %1220 = vset.pattern.permute.xlu0 0
  %1221 = vperm.xlu0 %1220, %v1195
  %v1222 = vpop.permute.xlu0 %1221
  %1225 = vset.pattern.permute.xlu0 0
  %1226 = vperm.xlu0 %1225, %v1196
  %v1227 = vpop.permute.xlu0 %1226
  %1230 = vset.pattern.permute.xlu0 0
  %1231 = vperm.xlu0 %1230, %v1197
  %v1232 = vpop.permute.xlu0 %1231
  %1235 = vset.pattern.permute.xlu0 0
  %1236 = vperm.xlu0 %1235, %v1198
  %v1237 = vpop.permute.xlu0 %1236
  %v1239 = vadd.f32 %v1174, %v1202
  %v1240 = vadd.f32 %v1175, %v1202
  %v1241 = vadd.f32 %v1176, %v1207
  %v1242 = vadd.f32 %v1177, %v1207
  %v1243 = vadd.f32 %v1178, %v1212
  %v1244 = vadd.f32 %v1179, %v1212
  %v1245 = vadd.f32 %v1180, %v1217
  %v1246 = vadd.f32 %v1181, %v1217
  %v1247 = vadd.f32 %v1182, %v1222
  %v1248 = vadd.f32 %v1183, %v1222
  %v1249 = vadd.f32 %v1184, %v1227
  %v1250 = vadd.f32 %v1185, %v1227
  %v1251 = vadd.f32 %v1186, %v1232
  %v1252 = vadd.f32 %v1187, %v1232
  %v1253 = vadd.f32 %v1188, %v1237
  %v1254 = vadd.f32 %v1189, %v1237
  %v1255 = vmax.f32 %v1239, 0.0
  %v1256 = vmax.f32 %v1240, 0.0
  %v1257 = vmax.f32 %v1241, 0.0
  %v1258 = vmax.f32 %v1242, 0.0
  %v1259 = vmax.f32 %v1243, 0.0
  %v1260 = vmax.f32 %v1244, 0.0
  %v1261 = vmax.f32 %v1245, 0.0
  %v1262 = vmax.f32 %v1246, 0.0
  %v1263 = vmax.f32 %v1247, 0.0
  %v1264 = vmax.f32 %v1248, 0.0
  %v1265 = vmax.f32 %v1249, 0.0
  %v1266 = vmax.f32 %v1250, 0.0
  %v1267 = vmax.f32 %v1251, 0.0
  %v1268 = vmax.f32 %v1252, 0.0
  %v1269 = vmax.f32 %v1253, 0.0
  %v1270 = vmax.f32 %v1254, 0.0
  %s1271 = smul.addr %s970, 8
  %s1272 = scalar_lea.vmem %s3, %s1271
  %1273 = vst [vmem:[%s1272] sm:$0xff] %v1255
  %1274 = vst.msk [vmem:[%s1272 + $0x8] sm:$0xff] %vm33, %v1256
  %1275 = vst [vmem:[%s1272 + $0x10] sm:$0xff] %v1257
  %1276 = vst.msk [vmem:[%s1272 + $0x18] sm:$0xff] %vm33, %v1258
  %1277 = vst [vmem:[%s1272 + $0x20] sm:$0xff] %v1259
  %1278 = vst.msk [vmem:[%s1272 + $0x28] sm:$0xff] %vm33, %v1260
  %1279 = vst [vmem:[%s1272 + $0x30] sm:$0xff] %v1261
  %1280 = vst.msk [vmem:[%s1272 + $0x38] sm:$0xff] %vm33, %v1262
  %1281 = vst [vmem:[%s1272 + $0x40] sm:$0xff] %v1263
  %1282 = vst.msk [vmem:[%s1272 + $0x48] sm:$0xff] %vm33, %v1264
  %1283 = vst [vmem:[%s1272 + $0x50] sm:$0xff] %v1265
  %1284 = vst.msk [vmem:[%s1272 + $0x58] sm:$0xff] %vm33, %v1266
  %1285 = vst [vmem:[%s1272 + $0x60] sm:$0xff] %v1267
  %1286 = vst.msk [vmem:[%s1272 + $0x68] sm:$0xff] %vm33, %v1268
  %1287 = vst [vmem:[%s1272 + $0x70] sm:$0xff] %v1269
  %1288 = vst.msk [vmem:[%s1272 + $0x78] sm:$0xff] %vm33, %v1270
  %s1289 = smul.u32 32, 2
  %s1290 = smul.addr %s1289, 8
  %s1291 = scalar_lea.vmem %s0, %s1290
  %v1292 = vld [vmem:[%s1291] sm:$0xff]
  %v1293 = vld [vmem:[%s1291 + $0x8] sm:$0xff]
  %v1294 = vld [vmem:[%s1291 + $0x10] sm:$0xff]
  %v1295 = vld [vmem:[%s1291 + $0x18] sm:$0xff]
  %v1296 = vld [vmem:[%s1291 + $0x20] sm:$0xff]
  %v1297 = vld [vmem:[%s1291 + $0x28] sm:$0xff]
  %v1298 = vld [vmem:[%s1291 + $0x30] sm:$0xff]
  %v1299 = vld [vmem:[%s1291 + $0x38] sm:$0xff]
  %v1300 = vld [vmem:[%s1291 + $0x40] sm:$0xff]
  %v1301 = vld [vmem:[%s1291 + $0x48] sm:$0xff]
  %v1302 = vld [vmem:[%s1291 + $0x50] sm:$0xff]
  %v1303 = vld [vmem:[%s1291 + $0x58] sm:$0xff]
  %v1304 = vld [vmem:[%s1291 + $0x60] sm:$0xff]
  %v1305 = vld [vmem:[%s1291 + $0x68] sm:$0xff]
  %v1306 = vld [vmem:[%s1291 + $0x70] sm:$0xff]
  %v1307 = vld [vmem:[%s1291 + $0x78] sm:$0xff]
  %v1308 = vsel %vm33, %v1293, 0.0
  %v1309 = vadd.f32 %v1292, %v1308
  %1310 = vadd.xlane.f32.xlu0 %v1309
  %v1311 = vpop.xlane.xlu0 %1310
  %v1312 = vsel %vm33, %v1295, 0.0
  %v1313 = vadd.f32 %v1294, %v1312
  %1314 = vadd.xlane.f32.xlu0 %v1313
  %v1315 = vpop.xlane.xlu0 %1314
  %v1316 = vsel %vm33, %v1297, 0.0
  %v1317 = vadd.f32 %v1296, %v1316
  %1318 = vadd.xlane.f32.xlu0 %v1317
  %v1319 = vpop.xlane.xlu0 %1318
  %v1320 = vsel %vm33, %v1299, 0.0
  %v1321 = vadd.f32 %v1298, %v1320
  %1322 = vadd.xlane.f32.xlu0 %v1321
  %v1323 = vpop.xlane.xlu0 %1322
  %v1324 = vsel %vm33, %v1301, 0.0
  %v1325 = vadd.f32 %v1300, %v1324
  %1326 = vadd.xlane.f32.xlu0 %v1325
  %v1327 = vpop.xlane.xlu0 %1326
  %v1328 = vsel %vm33, %v1303, 0.0
  %v1329 = vadd.f32 %v1302, %v1328
  %1330 = vadd.xlane.f32.xlu0 %v1329
  %v1331 = vpop.xlane.xlu0 %1330
  %v1332 = vsel %vm33, %v1305, 0.0
  %v1333 = vadd.f32 %v1304, %v1332
  %1334 = vadd.xlane.f32.xlu0 %v1333
  %v1335 = vpop.xlane.xlu0 %1334
  %v1336 = vsel %vm33, %v1307, 0.0
  %v1337 = vadd.f32 %v1306, %v1336
  %1338 = vadd.xlane.f32.xlu0 %v1337
  %v1339 = vpop.xlane.xlu0 %1338
  %v1340 = vmul.f32 %v1311, 0.0051020407
  %v1341 = vmul.f32 %v1315, 0.0051020407
  %v1342 = vmul.f32 %v1319, 0.0051020407
  %v1343 = vmul.f32 %v1323, 0.0051020407
  %v1344 = vmul.f32 %v1327, 0.0051020407
  %v1345 = vmul.f32 %v1331, 0.0051020407
  %v1346 = vmul.f32 %v1335, 0.0051020407
  %v1347 = vmul.f32 %v1339, 0.0051020407
  %v1348 = vsub.f32 %v1292, %v1340
  %v1349 = vsub.f32 %v1293, %v1340
  %v1350 = vsub.f32 %v1294, %v1341
  %v1351 = vsub.f32 %v1295, %v1341
  %v1352 = vsub.f32 %v1296, %v1342
  %v1353 = vsub.f32 %v1297, %v1342
  %v1354 = vsub.f32 %v1298, %v1343
  %v1355 = vsub.f32 %v1299, %v1343
  %v1356 = vsub.f32 %v1300, %v1344
  %v1357 = vsub.f32 %v1301, %v1344
  %v1358 = vsub.f32 %v1302, %v1345
  %v1359 = vsub.f32 %v1303, %v1345
  %v1360 = vsub.f32 %v1304, %v1346
  %v1361 = vsub.f32 %v1305, %v1346
  %v1362 = vsub.f32 %v1306, %v1347
  %v1363 = vsub.f32 %v1307, %v1347
  %v1364 = vmul.f32 %v1348, %v1348
  %v1365 = vmul.f32 %v1349, %v1349
  %v1366 = vmul.f32 %v1350, %v1350
  %v1367 = vmul.f32 %v1351, %v1351
  %v1368 = vmul.f32 %v1352, %v1352
  %v1369 = vmul.f32 %v1353, %v1353
  %v1370 = vmul.f32 %v1354, %v1354
  %v1371 = vmul.f32 %v1355, %v1355
  %v1372 = vmul.f32 %v1356, %v1356
  %v1373 = vmul.f32 %v1357, %v1357
  %v1374 = vmul.f32 %v1358, %v1358
  %v1375 = vmul.f32 %v1359, %v1359
  %v1376 = vmul.f32 %v1360, %v1360
  %v1377 = vmul.f32 %v1361, %v1361
  %v1378 = vmul.f32 %v1362, %v1362
  %v1379 = vmul.f32 %v1363, %v1363
  %v1380 = vsel %vm33, %v1365, 0.0
  %v1381 = vadd.f32 %v1364, %v1380
  %1382 = vadd.xlane.f32.xlu0 %v1381
  %v1383 = vpop.xlane.xlu0 %1382
  %v1384 = vsel %vm33, %v1367, 0.0
  %v1385 = vadd.f32 %v1366, %v1384
  %1386 = vadd.xlane.f32.xlu0 %v1385
  %v1387 = vpop.xlane.xlu0 %1386
  %v1388 = vsel %vm33, %v1369, 0.0
  %v1389 = vadd.f32 %v1368, %v1388
  %1390 = vadd.xlane.f32.xlu0 %v1389
  %v1391 = vpop.xlane.xlu0 %1390
  %v1392 = vsel %vm33, %v1371, 0.0
  %v1393 = vadd.f32 %v1370, %v1392
  %1394 = vadd.xlane.f32.xlu0 %v1393
  %v1395 = vpop.xlane.xlu0 %1394
  %v1396 = vsel %vm33, %v1373, 0.0
  %v1397 = vadd.f32 %v1372, %v1396
  %1398 = vadd.xlane.f32.xlu0 %v1397
  %v1399 = vpop.xlane.xlu0 %1398
  %v1400 = vsel %vm33, %v1375, 0.0
  %v1401 = vadd.f32 %v1374, %v1400
  %1402 = vadd.xlane.f32.xlu0 %v1401
  %v1403 = vpop.xlane.xlu0 %1402
  %v1404 = vsel %vm33, %v1377, 0.0
  %v1405 = vadd.f32 %v1376, %v1404
  %1406 = vadd.xlane.f32.xlu0 %v1405
  %v1407 = vpop.xlane.xlu0 %1406
  %v1408 = vsel %vm33, %v1379, 0.0
  %v1409 = vadd.f32 %v1378, %v1408
  %1410 = vadd.xlane.f32.xlu0 %v1409
  %v1411 = vpop.xlane.xlu0 %1410
  %v1412 = vmul.f32 %v1383, 0.0051020407
  %v1413 = vmul.f32 %v1387, 0.0051020407
  %v1414 = vmul.f32 %v1391, 0.0051020407
  %v1415 = vmul.f32 %v1395, 0.0051020407
  %v1416 = vmul.f32 %v1399, 0.0051020407
  %v1417 = vmul.f32 %v1403, 0.0051020407
  %v1418 = vmul.f32 %v1407, 0.0051020407
  %v1419 = vmul.f32 %v1411, 0.0051020407
  %v1420 = vadd.f32 %v1412, 1e-05
  %v1421 = vadd.f32 %v1413, 1e-05
  %v1422 = vadd.f32 %v1414, 1e-05
  %v1423 = vadd.f32 %v1415, 1e-05
  %v1424 = vadd.f32 %v1416, 1e-05
  %v1425 = vadd.f32 %v1417, 1e-05
  %v1426 = vadd.f32 %v1418, 1e-05
  %v1427 = vadd.f32 %v1419, 1e-05
  %v1428 = vrsqrt.pop %v1420
  %v1429 = vrsqrt.pop %v1421
  %v1430 = vrsqrt.pop %v1422
  %v1431 = vrsqrt.pop %v1423
  %v1432 = vrsqrt.pop %v1424
  %v1433 = vrsqrt.pop %v1425
  %v1434 = vrsqrt.pop %v1426
  %v1435 = vrsqrt.pop %v1427
  %s1436 = scalar_lea.vmem %s1, 256
  %v1437 = vld [vmem:[%s1436] sm:$0xff]
  %v1438 = vld [vmem:[%s1436 + $0x8] sm:$0xff]
  %v1439 = vld [vmem:[%s1436 + $0x10] sm:$0xff]
  %v1440 = vld [vmem:[%s1436 + $0x18] sm:$0xff]
  %v1441 = vld [vmem:[%s1436 + $0x20] sm:$0xff]
  %v1442 = vld [vmem:[%s1436 + $0x28] sm:$0xff]
  %v1443 = vld [vmem:[%s1436 + $0x30] sm:$0xff]
  %v1444 = vld [vmem:[%s1436 + $0x38] sm:$0xff]
  %v1445 = vmul.f32 %v1428, %v1437
  %v1446 = vmul.f32 %v1429, %v1438
  %v1447 = vmul.f32 %v1430, %v1439
  %v1448 = vmul.f32 %v1431, %v1440
  %v1449 = vmul.f32 %v1432, %v1441
  %v1450 = vmul.f32 %v1433, %v1442
  %v1451 = vmul.f32 %v1434, %v1443
  %v1452 = vmul.f32 %v1435, %v1444
  %1454 = vset.pattern.permute.xlu0 0
  %1455 = vperm.xlu0 %1454, %v1445
  %v1456 = vpop.permute.xlu0 %1455
  %1459 = vset.pattern.permute.xlu0 0
  %1460 = vperm.xlu0 %1459, %v1446
  %v1461 = vpop.permute.xlu0 %1460
  %1464 = vset.pattern.permute.xlu0 0
  %1465 = vperm.xlu0 %1464, %v1447
  %v1466 = vpop.permute.xlu0 %1465
  %1469 = vset.pattern.permute.xlu0 0
  %1470 = vperm.xlu0 %1469, %v1448
  %v1471 = vpop.permute.xlu0 %1470
  %1474 = vset.pattern.permute.xlu0 0
  %1475 = vperm.xlu0 %1474, %v1449
  %v1476 = vpop.permute.xlu0 %1475
  %1479 = vset.pattern.permute.xlu0 0
  %1480 = vperm.xlu0 %1479, %v1450
  %v1481 = vpop.permute.xlu0 %1480
  %1484 = vset.pattern.permute.xlu0 0
  %1485 = vperm.xlu0 %1484, %v1451
  %v1486 = vpop.permute.xlu0 %1485
  %1489 = vset.pattern.permute.xlu0 0
  %1490 = vperm.xlu0 %1489, %v1452
  %v1491 = vpop.permute.xlu0 %1490
  %v1493 = vmul.f32 %v1348, %v1456
  %v1494 = vmul.f32 %v1349, %v1456
  %v1495 = vmul.f32 %v1350, %v1461
  %v1496 = vmul.f32 %v1351, %v1461
  %v1497 = vmul.f32 %v1352, %v1466
  %v1498 = vmul.f32 %v1353, %v1466
  %v1499 = vmul.f32 %v1354, %v1471
  %v1500 = vmul.f32 %v1355, %v1471
  %v1501 = vmul.f32 %v1356, %v1476
  %v1502 = vmul.f32 %v1357, %v1476
  %v1503 = vmul.f32 %v1358, %v1481
  %v1504 = vmul.f32 %v1359, %v1481
  %v1505 = vmul.f32 %v1360, %v1486
  %v1506 = vmul.f32 %v1361, %v1486
  %v1507 = vmul.f32 %v1362, %v1491
  %v1508 = vmul.f32 %v1363, %v1491
  %s1509 = scalar_lea.vmem %s2, 256
  %v1510 = vld [vmem:[%s1509] sm:$0xff]
  %v1511 = vld [vmem:[%s1509 + $0x8] sm:$0xff]
  %v1512 = vld [vmem:[%s1509 + $0x10] sm:$0xff]
  %v1513 = vld [vmem:[%s1509 + $0x18] sm:$0xff]
  %v1514 = vld [vmem:[%s1509 + $0x20] sm:$0xff]
  %v1515 = vld [vmem:[%s1509 + $0x28] sm:$0xff]
  %v1516 = vld [vmem:[%s1509 + $0x30] sm:$0xff]
  %v1517 = vld [vmem:[%s1509 + $0x38] sm:$0xff]
  %1519 = vset.pattern.permute.xlu0 0
  %1520 = vperm.xlu0 %1519, %v1510
  %v1521 = vpop.permute.xlu0 %1520
  %1524 = vset.pattern.permute.xlu0 0
  %1525 = vperm.xlu0 %1524, %v1511
  %v1526 = vpop.permute.xlu0 %1525
  %1529 = vset.pattern.permute.xlu0 0
  %1530 = vperm.xlu0 %1529, %v1512
  %v1531 = vpop.permute.xlu0 %1530
  %1534 = vset.pattern.permute.xlu0 0
  %1535 = vperm.xlu0 %1534, %v1513
  %v1536 = vpop.permute.xlu0 %1535
  %1539 = vset.pattern.permute.xlu0 0
  %1540 = vperm.xlu0 %1539, %v1514
  %v1541 = vpop.permute.xlu0 %1540
  %1544 = vset.pattern.permute.xlu0 0
  %1545 = vperm.xlu0 %1544, %v1515
  %v1546 = vpop.permute.xlu0 %1545
  %1549 = vset.pattern.permute.xlu0 0
  %1550 = vperm.xlu0 %1549, %v1516
  %v1551 = vpop.permute.xlu0 %1550
  %1554 = vset.pattern.permute.xlu0 0
  %1555 = vperm.xlu0 %1554, %v1517
  %v1556 = vpop.permute.xlu0 %1555
  %v1558 = vadd.f32 %v1493, %v1521
  %v1559 = vadd.f32 %v1494, %v1521
  %v1560 = vadd.f32 %v1495, %v1526
  %v1561 = vadd.f32 %v1496, %v1526
  %v1562 = vadd.f32 %v1497, %v1531
  %v1563 = vadd.f32 %v1498, %v1531
  %v1564 = vadd.f32 %v1499, %v1536
  %v1565 = vadd.f32 %v1500, %v1536
  %v1566 = vadd.f32 %v1501, %v1541
  %v1567 = vadd.f32 %v1502, %v1541
  %v1568 = vadd.f32 %v1503, %v1546
  %v1569 = vadd.f32 %v1504, %v1546
  %v1570 = vadd.f32 %v1505, %v1551
  %v1571 = vadd.f32 %v1506, %v1551
  %v1572 = vadd.f32 %v1507, %v1556
  %v1573 = vadd.f32 %v1508, %v1556
  %v1574 = vmax.f32 %v1558, 0.0
  %v1575 = vmax.f32 %v1559, 0.0
  %v1576 = vmax.f32 %v1560, 0.0
  %v1577 = vmax.f32 %v1561, 0.0
  %v1578 = vmax.f32 %v1562, 0.0
  %v1579 = vmax.f32 %v1563, 0.0
  %v1580 = vmax.f32 %v1564, 0.0
  %v1581 = vmax.f32 %v1565, 0.0
  %v1582 = vmax.f32 %v1566, 0.0
  %v1583 = vmax.f32 %v1567, 0.0
  %v1584 = vmax.f32 %v1568, 0.0
  %v1585 = vmax.f32 %v1569, 0.0
  %v1586 = vmax.f32 %v1570, 0.0
  %v1587 = vmax.f32 %v1571, 0.0
  %v1588 = vmax.f32 %v1572, 0.0
  %v1589 = vmax.f32 %v1573, 0.0
  %s1590 = smul.addr %s1289, 8
  %s1591 = scalar_lea.vmem %s3, %s1590
  %1592 = vst [vmem:[%s1591] sm:$0xff] %v1574
  %1593 = vst.msk [vmem:[%s1591 + $0x8] sm:$0xff] %vm33, %v1575
  %1594 = vst [vmem:[%s1591 + $0x10] sm:$0xff] %v1576
  %1595 = vst.msk [vmem:[%s1591 + $0x18] sm:$0xff] %vm33, %v1577
  %1596 = vst [vmem:[%s1591 + $0x20] sm:$0xff] %v1578
  %1597 = vst.msk [vmem:[%s1591 + $0x28] sm:$0xff] %vm33, %v1579
  %1598 = vst [vmem:[%s1591 + $0x30] sm:$0xff] %v1580
  %1599 = vst.msk [vmem:[%s1591 + $0x38] sm:$0xff] %vm33, %v1581
  %1600 = vst [vmem:[%s1591 + $0x40] sm:$0xff] %v1582
  %1601 = vst.msk [vmem:[%s1591 + $0x48] sm:$0xff] %vm33, %v1583
  %1602 = vst [vmem:[%s1591 + $0x50] sm:$0xff] %v1584
  %1603 = vst.msk [vmem:[%s1591 + $0x58] sm:$0xff] %vm33, %v1585
  %1604 = vst [vmem:[%s1591 + $0x60] sm:$0xff] %v1586
  %1605 = vst.msk [vmem:[%s1591 + $0x68] sm:$0xff] %vm33, %v1587
  %1606 = vst [vmem:[%s1591 + $0x70] sm:$0xff] %v1588
  %1607 = vst.msk [vmem:[%s1591 + $0x78] sm:$0xff] %vm33, %v1589
  %s1608 = smul.u32 40, 2
  %s1609 = smul.addr %s1608, 8
  %s1610 = scalar_lea.vmem %s0, %s1609
  %v1611 = vld [vmem:[%s1610] sm:$0xff]
  %v1612 = vld [vmem:[%s1610 + $0x8] sm:$0xff]
  %v1613 = vld [vmem:[%s1610 + $0x10] sm:$0xff]
  %v1614 = vld [vmem:[%s1610 + $0x18] sm:$0xff]
  %v1615 = vld [vmem:[%s1610 + $0x20] sm:$0xff]
  %v1616 = vld [vmem:[%s1610 + $0x28] sm:$0xff]
  %v1617 = vld [vmem:[%s1610 + $0x30] sm:$0xff]
  %v1618 = vld [vmem:[%s1610 + $0x38] sm:$0xff]
  %v1619 = vld [vmem:[%s1610 + $0x40] sm:$0xff]
  %v1620 = vld [vmem:[%s1610 + $0x48] sm:$0xff]
  %v1621 = vld [vmem:[%s1610 + $0x50] sm:$0xff]
  %v1622 = vld [vmem:[%s1610 + $0x58] sm:$0xff]
  %v1623 = vld [vmem:[%s1610 + $0x60] sm:$0xff]
  %v1624 = vld [vmem:[%s1610 + $0x68] sm:$0xff]
  %v1625 = vld [vmem:[%s1610 + $0x70] sm:$0xff]
  %v1626 = vld [vmem:[%s1610 + $0x78] sm:$0xff]
  %v1627 = vsel %vm33, %v1612, 0.0
  %v1628 = vadd.f32 %v1611, %v1627
  %1629 = vadd.xlane.f32.xlu0 %v1628
  %v1630 = vpop.xlane.xlu0 %1629
  %v1631 = vsel %vm33, %v1614, 0.0
  %v1632 = vadd.f32 %v1613, %v1631
  %1633 = vadd.xlane.f32.xlu0 %v1632
  %v1634 = vpop.xlane.xlu0 %1633
  %v1635 = vsel %vm33, %v1616, 0.0
  %v1636 = vadd.f32 %v1615, %v1635
  %1637 = vadd.xlane.f32.xlu0 %v1636
  %v1638 = vpop.xlane.xlu0 %1637
  %v1639 = vsel %vm33, %v1618, 0.0
  %v1640 = vadd.f32 %v1617, %v1639
  %1641 = vadd.xlane.f32.xlu0 %v1640
  %v1642 = vpop.xlane.xlu0 %1641
  %v1643 = vsel %vm33, %v1620, 0.0
  %v1644 = vadd.f32 %v1619, %v1643
  %1645 = vadd.xlane.f32.xlu0 %v1644
  %v1646 = vpop.xlane.xlu0 %1645
  %v1647 = vsel %vm33, %v1622, 0.0
  %v1648 = vadd.f32 %v1621, %v1647
  %1649 = vadd.xlane.f32.xlu0 %v1648
  %v1650 = vpop.xlane.xlu0 %1649
  %v1651 = vsel %vm33, %v1624, 0.0
  %v1652 = vadd.f32 %v1623, %v1651
  %1653 = vadd.xlane.f32.xlu0 %v1652
  %v1654 = vpop.xlane.xlu0 %1653
  %v1655 = vsel %vm33, %v1626, 0.0
  %v1656 = vadd.f32 %v1625, %v1655
  %1657 = vadd.xlane.f32.xlu0 %v1656
  %v1658 = vpop.xlane.xlu0 %1657
  %v1659 = vmul.f32 %v1630, 0.0051020407
  %v1660 = vmul.f32 %v1634, 0.0051020407
  %v1661 = vmul.f32 %v1638, 0.0051020407
  %v1662 = vmul.f32 %v1642, 0.0051020407
  %v1663 = vmul.f32 %v1646, 0.0051020407
  %v1664 = vmul.f32 %v1650, 0.0051020407
  %v1665 = vmul.f32 %v1654, 0.0051020407
  %v1666 = vmul.f32 %v1658, 0.0051020407
  %v1667 = vsub.f32 %v1611, %v1659
  %v1668 = vsub.f32 %v1612, %v1659
  %v1669 = vsub.f32 %v1613, %v1660
  %v1670 = vsub.f32 %v1614, %v1660
  %v1671 = vsub.f32 %v1615, %v1661
  %v1672 = vsub.f32 %v1616, %v1661
  %v1673 = vsub.f32 %v1617, %v1662
  %v1674 = vsub.f32 %v1618, %v1662
  %v1675 = vsub.f32 %v1619, %v1663
  %v1676 = vsub.f32 %v1620, %v1663
  %v1677 = vsub.f32 %v1621, %v1664
  %v1678 = vsub.f32 %v1622, %v1664
  %v1679 = vsub.f32 %v1623, %v1665
  %v1680 = vsub.f32 %v1624, %v1665
  %v1681 = vsub.f32 %v1625, %v1666
  %v1682 = vsub.f32 %v1626, %v1666
  %v1683 = vmul.f32 %v1667, %v1667
  %v1684 = vmul.f32 %v1668, %v1668
  %v1685 = vmul.f32 %v1669, %v1669
  %v1686 = vmul.f32 %v1670, %v1670
  %v1687 = vmul.f32 %v1671, %v1671
  %v1688 = vmul.f32 %v1672, %v1672
  %v1689 = vmul.f32 %v1673, %v1673
  %v1690 = vmul.f32 %v1674, %v1674
  %v1691 = vmul.f32 %v1675, %v1675
  %v1692 = vmul.f32 %v1676, %v1676
  %v1693 = vmul.f32 %v1677, %v1677
  %v1694 = vmul.f32 %v1678, %v1678
  %v1695 = vmul.f32 %v1679, %v1679
  %v1696 = vmul.f32 %v1680, %v1680
  %v1697 = vmul.f32 %v1681, %v1681
  %v1698 = vmul.f32 %v1682, %v1682
  %v1699 = vsel %vm33, %v1684, 0.0
  %v1700 = vadd.f32 %v1683, %v1699
  %1701 = vadd.xlane.f32.xlu0 %v1700
  %v1702 = vpop.xlane.xlu0 %1701
  %v1703 = vsel %vm33, %v1686, 0.0
  %v1704 = vadd.f32 %v1685, %v1703
  %1705 = vadd.xlane.f32.xlu0 %v1704
  %v1706 = vpop.xlane.xlu0 %1705
  %v1707 = vsel %vm33, %v1688, 0.0
  %v1708 = vadd.f32 %v1687, %v1707
  %1709 = vadd.xlane.f32.xlu0 %v1708
  %v1710 = vpop.xlane.xlu0 %1709
  %v1711 = vsel %vm33, %v1690, 0.0
  %v1712 = vadd.f32 %v1689, %v1711
  %1713 = vadd.xlane.f32.xlu0 %v1712
  %v1714 = vpop.xlane.xlu0 %1713
  %v1715 = vsel %vm33, %v1692, 0.0
  %v1716 = vadd.f32 %v1691, %v1715
  %1717 = vadd.xlane.f32.xlu0 %v1716
  %v1718 = vpop.xlane.xlu0 %1717
  %v1719 = vsel %vm33, %v1694, 0.0
  %v1720 = vadd.f32 %v1693, %v1719
  %1721 = vadd.xlane.f32.xlu0 %v1720
  %v1722 = vpop.xlane.xlu0 %1721
  %v1723 = vsel %vm33, %v1696, 0.0
  %v1724 = vadd.f32 %v1695, %v1723
  %1725 = vadd.xlane.f32.xlu0 %v1724
  %v1726 = vpop.xlane.xlu0 %1725
  %v1727 = vsel %vm33, %v1698, 0.0
  %v1728 = vadd.f32 %v1697, %v1727
  %1729 = vadd.xlane.f32.xlu0 %v1728
  %v1730 = vpop.xlane.xlu0 %1729
  %v1731 = vmul.f32 %v1702, 0.0051020407
  %v1732 = vmul.f32 %v1706, 0.0051020407
  %v1733 = vmul.f32 %v1710, 0.0051020407
  %v1734 = vmul.f32 %v1714, 0.0051020407
  %v1735 = vmul.f32 %v1718, 0.0051020407
  %v1736 = vmul.f32 %v1722, 0.0051020407
  %v1737 = vmul.f32 %v1726, 0.0051020407
  %v1738 = vmul.f32 %v1730, 0.0051020407
  %v1739 = vadd.f32 %v1731, 1e-05
  %v1740 = vadd.f32 %v1732, 1e-05
  %v1741 = vadd.f32 %v1733, 1e-05
  %v1742 = vadd.f32 %v1734, 1e-05
  %v1743 = vadd.f32 %v1735, 1e-05
  %v1744 = vadd.f32 %v1736, 1e-05
  %v1745 = vadd.f32 %v1737, 1e-05
  %v1746 = vadd.f32 %v1738, 1e-05
  %v1747 = vrsqrt.pop %v1739
  %v1748 = vrsqrt.pop %v1740
  %v1749 = vrsqrt.pop %v1741
  %v1750 = vrsqrt.pop %v1742
  %v1751 = vrsqrt.pop %v1743
  %v1752 = vrsqrt.pop %v1744
  %v1753 = vrsqrt.pop %v1745
  %v1754 = vrsqrt.pop %v1746
  %s1755 = scalar_lea.vmem %s1, 320
  %v1756 = vld [vmem:[%s1755] sm:$0xff]
  %v1757 = vld [vmem:[%s1755 + $0x8] sm:$0xff]
  %v1758 = vld [vmem:[%s1755 + $0x10] sm:$0xff]
  %v1759 = vld [vmem:[%s1755 + $0x18] sm:$0xff]
  %v1760 = vld [vmem:[%s1755 + $0x20] sm:$0xff]
  %v1761 = vld [vmem:[%s1755 + $0x28] sm:$0xff]
  %v1762 = vld [vmem:[%s1755 + $0x30] sm:$0xff]
  %v1763 = vld [vmem:[%s1755 + $0x38] sm:$0xff]
  %v1764 = vmul.f32 %v1747, %v1756
  %v1765 = vmul.f32 %v1748, %v1757
  %v1766 = vmul.f32 %v1749, %v1758
  %v1767 = vmul.f32 %v1750, %v1759
  %v1768 = vmul.f32 %v1751, %v1760
  %v1769 = vmul.f32 %v1752, %v1761
  %v1770 = vmul.f32 %v1753, %v1762
  %v1771 = vmul.f32 %v1754, %v1763
  %1773 = vset.pattern.permute.xlu0 0
  %1774 = vperm.xlu0 %1773, %v1764
  %v1775 = vpop.permute.xlu0 %1774
  %1778 = vset.pattern.permute.xlu0 0
  %1779 = vperm.xlu0 %1778, %v1765
  %v1780 = vpop.permute.xlu0 %1779
  %1783 = vset.pattern.permute.xlu0 0
  %1784 = vperm.xlu0 %1783, %v1766
  %v1785 = vpop.permute.xlu0 %1784
  %1788 = vset.pattern.permute.xlu0 0
  %1789 = vperm.xlu0 %1788, %v1767
  %v1790 = vpop.permute.xlu0 %1789
  %1793 = vset.pattern.permute.xlu0 0
  %1794 = vperm.xlu0 %1793, %v1768
  %v1795 = vpop.permute.xlu0 %1794
  %1798 = vset.pattern.permute.xlu0 0
  %1799 = vperm.xlu0 %1798, %v1769
  %v1800 = vpop.permute.xlu0 %1799
  %1803 = vset.pattern.permute.xlu0 0
  %1804 = vperm.xlu0 %1803, %v1770
  %v1805 = vpop.permute.xlu0 %1804
  %1808 = vset.pattern.permute.xlu0 0
  %1809 = vperm.xlu0 %1808, %v1771
  %v1810 = vpop.permute.xlu0 %1809
  %v1812 = vmul.f32 %v1667, %v1775
  %v1813 = vmul.f32 %v1668, %v1775
  %v1814 = vmul.f32 %v1669, %v1780
  %v1815 = vmul.f32 %v1670, %v1780
  %v1816 = vmul.f32 %v1671, %v1785
  %v1817 = vmul.f32 %v1672, %v1785
  %v1818 = vmul.f32 %v1673, %v1790
  %v1819 = vmul.f32 %v1674, %v1790
  %v1820 = vmul.f32 %v1675, %v1795
  %v1821 = vmul.f32 %v1676, %v1795
  %v1822 = vmul.f32 %v1677, %v1800
  %v1823 = vmul.f32 %v1678, %v1800
  %v1824 = vmul.f32 %v1679, %v1805
  %v1825 = vmul.f32 %v1680, %v1805
  %v1826 = vmul.f32 %v1681, %v1810
  %v1827 = vmul.f32 %v1682, %v1810
  %s1828 = scalar_lea.vmem %s2, 320
  %v1829 = vld [vmem:[%s1828] sm:$0xff]
  %v1830 = vld [vmem:[%s1828 + $0x8] sm:$0xff]
  %v1831 = vld [vmem:[%s1828 + $0x10] sm:$0xff]
  %v1832 = vld [vmem:[%s1828 + $0x18] sm:$0xff]
  %v1833 = vld [vmem:[%s1828 + $0x20] sm:$0xff]
  %v1834 = vld [vmem:[%s1828 + $0x28] sm:$0xff]
  %v1835 = vld [vmem:[%s1828 + $0x30] sm:$0xff]
  %v1836 = vld [vmem:[%s1828 + $0x38] sm:$0xff]
  %1838 = vset.pattern.permute.xlu0 0
  %1839 = vperm.xlu0 %1838, %v1829
  %v1840 = vpop.permute.xlu0 %1839
  %1843 = vset.pattern.permute.xlu0 0
  %1844 = vperm.xlu0 %1843, %v1830
  %v1845 = vpop.permute.xlu0 %1844
  %1848 = vset.pattern.permute.xlu0 0
  %1849 = vperm.xlu0 %1848, %v1831
  %v1850 = vpop.permute.xlu0 %1849
  %1853 = vset.pattern.permute.xlu0 0
  %1854 = vperm.xlu0 %1853, %v1832
  %v1855 = vpop.permute.xlu0 %1854
  %1858 = vset.pattern.permute.xlu0 0
  %1859 = vperm.xlu0 %1858, %v1833
  %v1860 = vpop.permute.xlu0 %1859
  %1863 = vset.pattern.permute.xlu0 0
  %1864 = vperm.xlu0 %1863, %v1834
  %v1865 = vpop.permute.xlu0 %1864
  %1868 = vset.pattern.permute.xlu0 0
  %1869 = vperm.xlu0 %1868, %v1835
  %v1870 = vpop.permute.xlu0 %1869
  %1873 = vset.pattern.permute.xlu0 0
  %1874 = vperm.xlu0 %1873, %v1836
  %v1875 = vpop.permute.xlu0 %1874
  %v1877 = vadd.f32 %v1812, %v1840
  %v1878 = vadd.f32 %v1813, %v1840
  %v1879 = vadd.f32 %v1814, %v1845
  %v1880 = vadd.f32 %v1815, %v1845
  %v1881 = vadd.f32 %v1816, %v1850
  %v1882 = vadd.f32 %v1817, %v1850
  %v1883 = vadd.f32 %v1818, %v1855
  %v1884 = vadd.f32 %v1819, %v1855
  %v1885 = vadd.f32 %v1820, %v1860
  %v1886 = vadd.f32 %v1821, %v1860
  %v1887 = vadd.f32 %v1822, %v1865
  %v1888 = vadd.f32 %v1823, %v1865
  %v1889 = vadd.f32 %v1824, %v1870
  %v1890 = vadd.f32 %v1825, %v1870
  %v1891 = vadd.f32 %v1826, %v1875
  %v1892 = vadd.f32 %v1827, %v1875
  %v1893 = vmax.f32 %v1877, 0.0
  %v1894 = vmax.f32 %v1878, 0.0
  %v1895 = vmax.f32 %v1879, 0.0
  %v1896 = vmax.f32 %v1880, 0.0
  %v1897 = vmax.f32 %v1881, 0.0
  %v1898 = vmax.f32 %v1882, 0.0
  %v1899 = vmax.f32 %v1883, 0.0
  %v1900 = vmax.f32 %v1884, 0.0
  %v1901 = vmax.f32 %v1885, 0.0
  %v1902 = vmax.f32 %v1886, 0.0
  %v1903 = vmax.f32 %v1887, 0.0
  %v1904 = vmax.f32 %v1888, 0.0
  %v1905 = vmax.f32 %v1889, 0.0
  %v1906 = vmax.f32 %v1890, 0.0
  %v1907 = vmax.f32 %v1891, 0.0
  %v1908 = vmax.f32 %v1892, 0.0
  %s1909 = smul.addr %s1608, 8
  %s1910 = scalar_lea.vmem %s3, %s1909
  %1911 = vst [vmem:[%s1910] sm:$0xff] %v1893
  %1912 = vst.msk [vmem:[%s1910 + $0x8] sm:$0xff] %vm33, %v1894
  %1913 = vst [vmem:[%s1910 + $0x10] sm:$0xff] %v1895
  %1914 = vst.msk [vmem:[%s1910 + $0x18] sm:$0xff] %vm33, %v1896
  %1915 = vst [vmem:[%s1910 + $0x20] sm:$0xff] %v1897
  %1916 = vst.msk [vmem:[%s1910 + $0x28] sm:$0xff] %vm33, %v1898
  %1917 = vst [vmem:[%s1910 + $0x30] sm:$0xff] %v1899
  %1918 = vst.msk [vmem:[%s1910 + $0x38] sm:$0xff] %vm33, %v1900
  %1919 = vst [vmem:[%s1910 + $0x40] sm:$0xff] %v1901
  %1920 = vst.msk [vmem:[%s1910 + $0x48] sm:$0xff] %vm33, %v1902
  %1921 = vst [vmem:[%s1910 + $0x50] sm:$0xff] %v1903
  %1922 = vst.msk [vmem:[%s1910 + $0x58] sm:$0xff] %vm33, %v1904
  %1923 = vst [vmem:[%s1910 + $0x60] sm:$0xff] %v1905
  %1924 = vst.msk [vmem:[%s1910 + $0x68] sm:$0xff] %vm33, %v1906
  %1925 = vst [vmem:[%s1910 + $0x70] sm:$0xff] %v1907
  %1926 = vst.msk [vmem:[%s1910 + $0x78] sm:$0xff] %vm33, %v1908
  %s1927 = smul.u32 48, 2
  %s1928 = smul.addr %s1927, 8
  %s1929 = scalar_lea.vmem %s0, %s1928
  %v1930 = vld [vmem:[%s1929] sm:$0xff]
  %v1931 = vld [vmem:[%s1929 + $0x8] sm:$0xff]
  %v1932 = vld [vmem:[%s1929 + $0x10] sm:$0xff]
  %v1933 = vld [vmem:[%s1929 + $0x18] sm:$0xff]
  %v1934 = vld [vmem:[%s1929 + $0x20] sm:$0xff]
  %v1935 = vld [vmem:[%s1929 + $0x28] sm:$0xff]
  %v1936 = vld [vmem:[%s1929 + $0x30] sm:$0xff]
  %v1937 = vld [vmem:[%s1929 + $0x38] sm:$0xff]
  %v1938 = vld [vmem:[%s1929 + $0x40] sm:$0xff]
  %v1939 = vld [vmem:[%s1929 + $0x48] sm:$0xff]
  %v1940 = vld [vmem:[%s1929 + $0x50] sm:$0xff]
  %v1941 = vld [vmem:[%s1929 + $0x58] sm:$0xff]
  %v1942 = vld [vmem:[%s1929 + $0x60] sm:$0xff]
  %v1943 = vld [vmem:[%s1929 + $0x68] sm:$0xff]
  %v1944 = vld [vmem:[%s1929 + $0x70] sm:$0xff]
  %v1945 = vld [vmem:[%s1929 + $0x78] sm:$0xff]
  %v1946 = vsel %vm33, %v1931, 0.0
  %v1947 = vadd.f32 %v1930, %v1946
  %1948 = vadd.xlane.f32.xlu0 %v1947
  %v1949 = vpop.xlane.xlu0 %1948
  %v1950 = vsel %vm33, %v1933, 0.0
  %v1951 = vadd.f32 %v1932, %v1950
  %1952 = vadd.xlane.f32.xlu0 %v1951
  %v1953 = vpop.xlane.xlu0 %1952
  %v1954 = vsel %vm33, %v1935, 0.0
  %v1955 = vadd.f32 %v1934, %v1954
  %1956 = vadd.xlane.f32.xlu0 %v1955
  %v1957 = vpop.xlane.xlu0 %1956
  %v1958 = vsel %vm33, %v1937, 0.0
  %v1959 = vadd.f32 %v1936, %v1958
  %1960 = vadd.xlane.f32.xlu0 %v1959
  %v1961 = vpop.xlane.xlu0 %1960
  %v1962 = vsel %vm33, %v1939, 0.0
  %v1963 = vadd.f32 %v1938, %v1962
  %1964 = vadd.xlane.f32.xlu0 %v1963
  %v1965 = vpop.xlane.xlu0 %1964
  %v1966 = vsel %vm33, %v1941, 0.0
  %v1967 = vadd.f32 %v1940, %v1966
  %1968 = vadd.xlane.f32.xlu0 %v1967
  %v1969 = vpop.xlane.xlu0 %1968
  %v1970 = vsel %vm33, %v1943, 0.0
  %v1971 = vadd.f32 %v1942, %v1970
  %1972 = vadd.xlane.f32.xlu0 %v1971
  %v1973 = vpop.xlane.xlu0 %1972
  %v1974 = vsel %vm33, %v1945, 0.0
  %v1975 = vadd.f32 %v1944, %v1974
  %1976 = vadd.xlane.f32.xlu0 %v1975
  %v1977 = vpop.xlane.xlu0 %1976
  %v1978 = vmul.f32 %v1949, 0.0051020407
  %v1979 = vmul.f32 %v1953, 0.0051020407
  %v1980 = vmul.f32 %v1957, 0.0051020407
  %v1981 = vmul.f32 %v1961, 0.0051020407
  %v1982 = vmul.f32 %v1965, 0.0051020407
  %v1983 = vmul.f32 %v1969, 0.0051020407
  %v1984 = vmul.f32 %v1973, 0.0051020407
  %v1985 = vmul.f32 %v1977, 0.0051020407
  %v1986 = vsub.f32 %v1930, %v1978
  %v1987 = vsub.f32 %v1931, %v1978
  %v1988 = vsub.f32 %v1932, %v1979
  %v1989 = vsub.f32 %v1933, %v1979
  %v1990 = vsub.f32 %v1934, %v1980
  %v1991 = vsub.f32 %v1935, %v1980
  %v1992 = vsub.f32 %v1936, %v1981
  %v1993 = vsub.f32 %v1937, %v1981
  %v1994 = vsub.f32 %v1938, %v1982
  %v1995 = vsub.f32 %v1939, %v1982
  %v1996 = vsub.f32 %v1940, %v1983
  %v1997 = vsub.f32 %v1941, %v1983
  %v1998 = vsub.f32 %v1942, %v1984
  %v1999 = vsub.f32 %v1943, %v1984
  %v2000 = vsub.f32 %v1944, %v1985
  %v2001 = vsub.f32 %v1945, %v1985
  %v2002 = vmul.f32 %v1986, %v1986
  %v2003 = vmul.f32 %v1987, %v1987
  %v2004 = vmul.f32 %v1988, %v1988
  %v2005 = vmul.f32 %v1989, %v1989
  %v2006 = vmul.f32 %v1990, %v1990
  %v2007 = vmul.f32 %v1991, %v1991
  %v2008 = vmul.f32 %v1992, %v1992
  %v2009 = vmul.f32 %v1993, %v1993
  %v2010 = vmul.f32 %v1994, %v1994
  %v2011 = vmul.f32 %v1995, %v1995
  %v2012 = vmul.f32 %v1996, %v1996
  %v2013 = vmul.f32 %v1997, %v1997
  %v2014 = vmul.f32 %v1998, %v1998
  %v2015 = vmul.f32 %v1999, %v1999
  %v2016 = vmul.f32 %v2000, %v2000
  %v2017 = vmul.f32 %v2001, %v2001
  %v2018 = vsel %vm33, %v2003, 0.0
  %v2019 = vadd.f32 %v2002, %v2018
  %2020 = vadd.xlane.f32.xlu0 %v2019
  %v2021 = vpop.xlane.xlu0 %2020
  %v2022 = vsel %vm33, %v2005, 0.0
  %v2023 = vadd.f32 %v2004, %v2022
  %2024 = vadd.xlane.f32.xlu0 %v2023
  %v2025 = vpop.xlane.xlu0 %2024
  %v2026 = vsel %vm33, %v2007, 0.0
  %v2027 = vadd.f32 %v2006, %v2026
  %2028 = vadd.xlane.f32.xlu0 %v2027
  %v2029 = vpop.xlane.xlu0 %2028
  %v2030 = vsel %vm33, %v2009, 0.0
  %v2031 = vadd.f32 %v2008, %v2030
  %2032 = vadd.xlane.f32.xlu0 %v2031
  %v2033 = vpop.xlane.xlu0 %2032
  %v2034 = vsel %vm33, %v2011, 0.0
  %v2035 = vadd.f32 %v2010, %v2034
  %2036 = vadd.xlane.f32.xlu0 %v2035
  %v2037 = vpop.xlane.xlu0 %2036
  %v2038 = vsel %vm33, %v2013, 0.0
  %v2039 = vadd.f32 %v2012, %v2038
  %2040 = vadd.xlane.f32.xlu0 %v2039
  %v2041 = vpop.xlane.xlu0 %2040
  %v2042 = vsel %vm33, %v2015, 0.0
  %v2043 = vadd.f32 %v2014, %v2042
  %2044 = vadd.xlane.f32.xlu0 %v2043
  %v2045 = vpop.xlane.xlu0 %2044
  %v2046 = vsel %vm33, %v2017, 0.0
  %v2047 = vadd.f32 %v2016, %v2046
  %2048 = vadd.xlane.f32.xlu0 %v2047
  %v2049 = vpop.xlane.xlu0 %2048
  %v2050 = vmul.f32 %v2021, 0.0051020407
  %v2051 = vmul.f32 %v2025, 0.0051020407
  %v2052 = vmul.f32 %v2029, 0.0051020407
  %v2053 = vmul.f32 %v2033, 0.0051020407
  %v2054 = vmul.f32 %v2037, 0.0051020407
  %v2055 = vmul.f32 %v2041, 0.0051020407
  %v2056 = vmul.f32 %v2045, 0.0051020407
  %v2057 = vmul.f32 %v2049, 0.0051020407
  %v2058 = vadd.f32 %v2050, 1e-05
  %v2059 = vadd.f32 %v2051, 1e-05
  %v2060 = vadd.f32 %v2052, 1e-05
  %v2061 = vadd.f32 %v2053, 1e-05
  %v2062 = vadd.f32 %v2054, 1e-05
  %v2063 = vadd.f32 %v2055, 1e-05
  %v2064 = vadd.f32 %v2056, 1e-05
  %v2065 = vadd.f32 %v2057, 1e-05
  %v2066 = vrsqrt.pop %v2058
  %v2067 = vrsqrt.pop %v2059
  %v2068 = vrsqrt.pop %v2060
  %v2069 = vrsqrt.pop %v2061
  %v2070 = vrsqrt.pop %v2062
  %v2071 = vrsqrt.pop %v2063
  %v2072 = vrsqrt.pop %v2064
  %v2073 = vrsqrt.pop %v2065
  %s2074 = scalar_lea.vmem %s1, 384
  %v2075 = vld [vmem:[%s2074] sm:$0xff]
  %v2076 = vld [vmem:[%s2074 + $0x8] sm:$0xff]
  %v2077 = vld [vmem:[%s2074 + $0x10] sm:$0xff]
  %v2078 = vld [vmem:[%s2074 + $0x18] sm:$0xff]
  %v2079 = vld [vmem:[%s2074 + $0x20] sm:$0xff]
  %v2080 = vld [vmem:[%s2074 + $0x28] sm:$0xff]
  %v2081 = vld [vmem:[%s2074 + $0x30] sm:$0xff]
  %v2082 = vld [vmem:[%s2074 + $0x38] sm:$0xff]
  %v2083 = vmul.f32 %v2066, %v2075
  %v2084 = vmul.f32 %v2067, %v2076
  %v2085 = vmul.f32 %v2068, %v2077
  %v2086 = vmul.f32 %v2069, %v2078
  %v2087 = vmul.f32 %v2070, %v2079
  %v2088 = vmul.f32 %v2071, %v2080
  %v2089 = vmul.f32 %v2072, %v2081
  %v2090 = vmul.f32 %v2073, %v2082
  %2092 = vset.pattern.permute.xlu0 0
  %2093 = vperm.xlu0 %2092, %v2083
  %v2094 = vpop.permute.xlu0 %2093
  %2097 = vset.pattern.permute.xlu0 0
  %2098 = vperm.xlu0 %2097, %v2084
  %v2099 = vpop.permute.xlu0 %2098
  %2102 = vset.pattern.permute.xlu0 0
  %2103 = vperm.xlu0 %2102, %v2085
  %v2104 = vpop.permute.xlu0 %2103
  %2107 = vset.pattern.permute.xlu0 0
  %2108 = vperm.xlu0 %2107, %v2086
  %v2109 = vpop.permute.xlu0 %2108
  %2112 = vset.pattern.permute.xlu0 0
  %2113 = vperm.xlu0 %2112, %v2087
  %v2114 = vpop.permute.xlu0 %2113
  %2117 = vset.pattern.permute.xlu0 0
  %2118 = vperm.xlu0 %2117, %v2088
  %v2119 = vpop.permute.xlu0 %2118
  %2122 = vset.pattern.permute.xlu0 0
  %2123 = vperm.xlu0 %2122, %v2089
  %v2124 = vpop.permute.xlu0 %2123
  %2127 = vset.pattern.permute.xlu0 0
  %2128 = vperm.xlu0 %2127, %v2090
  %v2129 = vpop.permute.xlu0 %2128
  %v2131 = vmul.f32 %v1986, %v2094
  %v2132 = vmul.f32 %v1987, %v2094
  %v2133 = vmul.f32 %v1988, %v2099
  %v2134 = vmul.f32 %v1989, %v2099
  %v2135 = vmul.f32 %v1990, %v2104
  %v2136 = vmul.f32 %v1991, %v2104
  %v2137 = vmul.f32 %v1992, %v2109
  %v2138 = vmul.f32 %v1993, %v2109
  %v2139 = vmul.f32 %v1994, %v2114
  %v2140 = vmul.f32 %v1995, %v2114
  %v2141 = vmul.f32 %v1996, %v2119
  %v2142 = vmul.f32 %v1997, %v2119
  %v2143 = vmul.f32 %v1998, %v2124
  %v2144 = vmul.f32 %v1999, %v2124
  %v2145 = vmul.f32 %v2000, %v2129
  %v2146 = vmul.f32 %v2001, %v2129
  %s2147 = scalar_lea.vmem %s2, 384
  %v2148 = vld [vmem:[%s2147] sm:$0xff]
  %v2149 = vld [vmem:[%s2147 + $0x8] sm:$0xff]
  %v2150 = vld [vmem:[%s2147 + $0x10] sm:$0xff]
  %v2151 = vld [vmem:[%s2147 + $0x18] sm:$0xff]
  %v2152 = vld [vmem:[%s2147 + $0x20] sm:$0xff]
  %v2153 = vld [vmem:[%s2147 + $0x28] sm:$0xff]
  %v2154 = vld [vmem:[%s2147 + $0x30] sm:$0xff]
  %v2155 = vld [vmem:[%s2147 + $0x38] sm:$0xff]
  %2157 = vset.pattern.permute.xlu0 0
  %2158 = vperm.xlu0 %2157, %v2148
  %v2159 = vpop.permute.xlu0 %2158
  %2162 = vset.pattern.permute.xlu0 0
  %2163 = vperm.xlu0 %2162, %v2149
  %v2164 = vpop.permute.xlu0 %2163
  %2167 = vset.pattern.permute.xlu0 0
  %2168 = vperm.xlu0 %2167, %v2150
  %v2169 = vpop.permute.xlu0 %2168
  %2172 = vset.pattern.permute.xlu0 0
  %2173 = vperm.xlu0 %2172, %v2151
  %v2174 = vpop.permute.xlu0 %2173
  %2177 = vset.pattern.permute.xlu0 0
  %2178 = vperm.xlu0 %2177, %v2152
  %v2179 = vpop.permute.xlu0 %2178
  %2182 = vset.pattern.permute.xlu0 0
  %2183 = vperm.xlu0 %2182, %v2153
  %v2184 = vpop.permute.xlu0 %2183
  %2187 = vset.pattern.permute.xlu0 0
  %2188 = vperm.xlu0 %2187, %v2154
  %v2189 = vpop.permute.xlu0 %2188
  %2192 = vset.pattern.permute.xlu0 0
  %2193 = vperm.xlu0 %2192, %v2155
  %v2194 = vpop.permute.xlu0 %2193
  %v2196 = vadd.f32 %v2131, %v2159
  %v2197 = vadd.f32 %v2132, %v2159
  %v2198 = vadd.f32 %v2133, %v2164
  %v2199 = vadd.f32 %v2134, %v2164
  %v2200 = vadd.f32 %v2135, %v2169
  %v2201 = vadd.f32 %v2136, %v2169
  %v2202 = vadd.f32 %v2137, %v2174
  %v2203 = vadd.f32 %v2138, %v2174
  %v2204 = vadd.f32 %v2139, %v2179
  %v2205 = vadd.f32 %v2140, %v2179
  %v2206 = vadd.f32 %v2141, %v2184
  %v2207 = vadd.f32 %v2142, %v2184
  %v2208 = vadd.f32 %v2143, %v2189
  %v2209 = vadd.f32 %v2144, %v2189
  %v2210 = vadd.f32 %v2145, %v2194
  %v2211 = vadd.f32 %v2146, %v2194
  %v2212 = vmax.f32 %v2196, 0.0
  %v2213 = vmax.f32 %v2197, 0.0
  %v2214 = vmax.f32 %v2198, 0.0
  %v2215 = vmax.f32 %v2199, 0.0
  %v2216 = vmax.f32 %v2200, 0.0
  %v2217 = vmax.f32 %v2201, 0.0
  %v2218 = vmax.f32 %v2202, 0.0
  %v2219 = vmax.f32 %v2203, 0.0
  %v2220 = vmax.f32 %v2204, 0.0
  %v2221 = vmax.f32 %v2205, 0.0
  %v2222 = vmax.f32 %v2206, 0.0
  %v2223 = vmax.f32 %v2207, 0.0
  %v2224 = vmax.f32 %v2208, 0.0
  %v2225 = vmax.f32 %v2209, 0.0
  %v2226 = vmax.f32 %v2210, 0.0
  %v2227 = vmax.f32 %v2211, 0.0
  %s2228 = smul.addr %s1927, 8
  %s2229 = scalar_lea.vmem %s3, %s2228
  %2230 = vst [vmem:[%s2229] sm:$0xff] %v2212
  %2231 = vst.msk [vmem:[%s2229 + $0x8] sm:$0xff] %vm33, %v2213
  %2232 = vst [vmem:[%s2229 + $0x10] sm:$0xff] %v2214
  %2233 = vst.msk [vmem:[%s2229 + $0x18] sm:$0xff] %vm33, %v2215
  %2234 = vst [vmem:[%s2229 + $0x20] sm:$0xff] %v2216
  %2235 = vst.msk [vmem:[%s2229 + $0x28] sm:$0xff] %vm33, %v2217
  %2236 = vst [vmem:[%s2229 + $0x30] sm:$0xff] %v2218
  %2237 = vst.msk [vmem:[%s2229 + $0x38] sm:$0xff] %vm33, %v2219
  %2238 = vst [vmem:[%s2229 + $0x40] sm:$0xff] %v2220
  %2239 = vst.msk [vmem:[%s2229 + $0x48] sm:$0xff] %vm33, %v2221
  %2240 = vst [vmem:[%s2229 + $0x50] sm:$0xff] %v2222
  %2241 = vst.msk [vmem:[%s2229 + $0x58] sm:$0xff] %vm33, %v2223
  %2242 = vst [vmem:[%s2229 + $0x60] sm:$0xff] %v2224
  %2243 = vst.msk [vmem:[%s2229 + $0x68] sm:$0xff] %vm33, %v2225
  %2244 = vst [vmem:[%s2229 + $0x70] sm:$0xff] %v2226
  %2245 = vst.msk [vmem:[%s2229 + $0x78] sm:$0xff] %vm33, %v2227
  %s2246 = smul.u32 56, 2
  %s2247 = smul.addr %s2246, 8
  %s2248 = scalar_lea.vmem %s0, %s2247
  %v2249 = vld [vmem:[%s2248] sm:$0xff]
  %v2250 = vld [vmem:[%s2248 + $0x8] sm:$0xff]
  %v2251 = vld [vmem:[%s2248 + $0x10] sm:$0xff]
  %v2252 = vld [vmem:[%s2248 + $0x18] sm:$0xff]
  %v2253 = vld [vmem:[%s2248 + $0x20] sm:$0xff]
  %v2254 = vld [vmem:[%s2248 + $0x28] sm:$0xff]
  %v2255 = vld [vmem:[%s2248 + $0x30] sm:$0xff]
  %v2256 = vld [vmem:[%s2248 + $0x38] sm:$0xff]
  %v2257 = vld [vmem:[%s2248 + $0x40] sm:$0xff]
  %v2258 = vld [vmem:[%s2248 + $0x48] sm:$0xff]
  %v2259 = vld [vmem:[%s2248 + $0x50] sm:$0xff]
  %v2260 = vld [vmem:[%s2248 + $0x58] sm:$0xff]
  %v2261 = vld [vmem:[%s2248 + $0x60] sm:$0xff]
  %v2262 = vld [vmem:[%s2248 + $0x68] sm:$0xff]
  %v2263 = vld [vmem:[%s2248 + $0x70] sm:$0xff]
  %v2264 = vld [vmem:[%s2248 + $0x78] sm:$0xff]
  %v2265 = vsel %vm33, %v2250, 0.0
  %v2266 = vadd.f32 %v2249, %v2265
  %2267 = vadd.xlane.f32.xlu0 %v2266
  %v2268 = vpop.xlane.xlu0 %2267
  %v2269 = vsel %vm33, %v2252, 0.0
  %v2270 = vadd.f32 %v2251, %v2269
  %2271 = vadd.xlane.f32.xlu0 %v2270
  %v2272 = vpop.xlane.xlu0 %2271
  %v2273 = vsel %vm33, %v2254, 0.0
  %v2274 = vadd.f32 %v2253, %v2273
  %2275 = vadd.xlane.f32.xlu0 %v2274
  %v2276 = vpop.xlane.xlu0 %2275
  %v2277 = vsel %vm33, %v2256, 0.0
  %v2278 = vadd.f32 %v2255, %v2277
  %2279 = vadd.xlane.f32.xlu0 %v2278
  %v2280 = vpop.xlane.xlu0 %2279
  %v2281 = vsel %vm33, %v2258, 0.0
  %v2282 = vadd.f32 %v2257, %v2281
  %2283 = vadd.xlane.f32.xlu0 %v2282
  %v2284 = vpop.xlane.xlu0 %2283
  %v2285 = vsel %vm33, %v2260, 0.0
  %v2286 = vadd.f32 %v2259, %v2285
  %2287 = vadd.xlane.f32.xlu0 %v2286
  %v2288 = vpop.xlane.xlu0 %2287
  %v2289 = vsel %vm33, %v2262, 0.0
  %v2290 = vadd.f32 %v2261, %v2289
  %2291 = vadd.xlane.f32.xlu0 %v2290
  %v2292 = vpop.xlane.xlu0 %2291
  %v2293 = vsel %vm33, %v2264, 0.0
  %v2294 = vadd.f32 %v2263, %v2293
  %2295 = vadd.xlane.f32.xlu0 %v2294
  %v2296 = vpop.xlane.xlu0 %2295
  %v2297 = vmul.f32 %v2268, 0.0051020407
  %v2298 = vmul.f32 %v2272, 0.0051020407
  %v2299 = vmul.f32 %v2276, 0.0051020407
  %v2300 = vmul.f32 %v2280, 0.0051020407
  %v2301 = vmul.f32 %v2284, 0.0051020407
  %v2302 = vmul.f32 %v2288, 0.0051020407
  %v2303 = vmul.f32 %v2292, 0.0051020407
  %v2304 = vmul.f32 %v2296, 0.0051020407
  %v2305 = vsub.f32 %v2249, %v2297
  %v2306 = vsub.f32 %v2250, %v2297
  %v2307 = vsub.f32 %v2251, %v2298
  %v2308 = vsub.f32 %v2252, %v2298
  %v2309 = vsub.f32 %v2253, %v2299
  %v2310 = vsub.f32 %v2254, %v2299
  %v2311 = vsub.f32 %v2255, %v2300
  %v2312 = vsub.f32 %v2256, %v2300
  %v2313 = vsub.f32 %v2257, %v2301
  %v2314 = vsub.f32 %v2258, %v2301
  %v2315 = vsub.f32 %v2259, %v2302
  %v2316 = vsub.f32 %v2260, %v2302
  %v2317 = vsub.f32 %v2261, %v2303
  %v2318 = vsub.f32 %v2262, %v2303
  %v2319 = vsub.f32 %v2263, %v2304
  %v2320 = vsub.f32 %v2264, %v2304
  %v2321 = vmul.f32 %v2305, %v2305
  %v2322 = vmul.f32 %v2306, %v2306
  %v2323 = vmul.f32 %v2307, %v2307
  %v2324 = vmul.f32 %v2308, %v2308
  %v2325 = vmul.f32 %v2309, %v2309
  %v2326 = vmul.f32 %v2310, %v2310
  %v2327 = vmul.f32 %v2311, %v2311
  %v2328 = vmul.f32 %v2312, %v2312
  %v2329 = vmul.f32 %v2313, %v2313
  %v2330 = vmul.f32 %v2314, %v2314
  %v2331 = vmul.f32 %v2315, %v2315
  %v2332 = vmul.f32 %v2316, %v2316
  %v2333 = vmul.f32 %v2317, %v2317
  %v2334 = vmul.f32 %v2318, %v2318
  %v2335 = vmul.f32 %v2319, %v2319
  %v2336 = vmul.f32 %v2320, %v2320
  %v2337 = vsel %vm33, %v2322, 0.0
  %v2338 = vadd.f32 %v2321, %v2337
  %2339 = vadd.xlane.f32.xlu0 %v2338
  %v2340 = vpop.xlane.xlu0 %2339
  %v2341 = vsel %vm33, %v2324, 0.0
  %v2342 = vadd.f32 %v2323, %v2341
  %2343 = vadd.xlane.f32.xlu0 %v2342
  %v2344 = vpop.xlane.xlu0 %2343
  %v2345 = vsel %vm33, %v2326, 0.0
  %v2346 = vadd.f32 %v2325, %v2345
  %2347 = vadd.xlane.f32.xlu0 %v2346
  %v2348 = vpop.xlane.xlu0 %2347
  %v2349 = vsel %vm33, %v2328, 0.0
  %v2350 = vadd.f32 %v2327, %v2349
  %2351 = vadd.xlane.f32.xlu0 %v2350
  %v2352 = vpop.xlane.xlu0 %2351
  %v2353 = vsel %vm33, %v2330, 0.0
  %v2354 = vadd.f32 %v2329, %v2353
  %2355 = vadd.xlane.f32.xlu0 %v2354
  %v2356 = vpop.xlane.xlu0 %2355
  %v2357 = vsel %vm33, %v2332, 0.0
  %v2358 = vadd.f32 %v2331, %v2357
  %2359 = vadd.xlane.f32.xlu0 %v2358
  %v2360 = vpop.xlane.xlu0 %2359
  %v2361 = vsel %vm33, %v2334, 0.0
  %v2362 = vadd.f32 %v2333, %v2361
  %2363 = vadd.xlane.f32.xlu0 %v2362
  %v2364 = vpop.xlane.xlu0 %2363
  %v2365 = vsel %vm33, %v2336, 0.0
  %v2366 = vadd.f32 %v2335, %v2365
  %2367 = vadd.xlane.f32.xlu0 %v2366
  %v2368 = vpop.xlane.xlu0 %2367
  %v2369 = vmul.f32 %v2340, 0.0051020407
  %v2370 = vmul.f32 %v2344, 0.0051020407
  %v2371 = vmul.f32 %v2348, 0.0051020407
  %v2372 = vmul.f32 %v2352, 0.0051020407
  %v2373 = vmul.f32 %v2356, 0.0051020407
  %v2374 = vmul.f32 %v2360, 0.0051020407
  %v2375 = vmul.f32 %v2364, 0.0051020407
  %v2376 = vmul.f32 %v2368, 0.0051020407
  %v2377 = vadd.f32 %v2369, 1e-05
  %v2378 = vadd.f32 %v2370, 1e-05
  %v2379 = vadd.f32 %v2371, 1e-05
  %v2380 = vadd.f32 %v2372, 1e-05
  %v2381 = vadd.f32 %v2373, 1e-05
  %v2382 = vadd.f32 %v2374, 1e-05
  %v2383 = vadd.f32 %v2375, 1e-05
  %v2384 = vadd.f32 %v2376, 1e-05
  %v2385 = vrsqrt.pop %v2377
  %v2386 = vrsqrt.pop %v2378
  %v2387 = vrsqrt.pop %v2379
  %v2388 = vrsqrt.pop %v2380
  %v2389 = vrsqrt.pop %v2381
  %v2390 = vrsqrt.pop %v2382
  %v2391 = vrsqrt.pop %v2383
  %v2392 = vrsqrt.pop %v2384
  %s2393 = scalar_lea.vmem %s1, 448
  %v2394 = vld [vmem:[%s2393] sm:$0xff]
  %v2395 = vld [vmem:[%s2393 + $0x8] sm:$0xff]
  %v2396 = vld [vmem:[%s2393 + $0x10] sm:$0xff]
  %v2397 = vld [vmem:[%s2393 + $0x18] sm:$0xff]
  %v2398 = vld [vmem:[%s2393 + $0x20] sm:$0xff]
  %v2399 = vld [vmem:[%s2393 + $0x28] sm:$0xff]
  %v2400 = vld [vmem:[%s2393 + $0x30] sm:$0xff]
  %v2401 = vld [vmem:[%s2393 + $0x38] sm:$0xff]
  %v2402 = vmul.f32 %v2385, %v2394
  %v2403 = vmul.f32 %v2386, %v2395
  %v2404 = vmul.f32 %v2387, %v2396
  %v2405 = vmul.f32 %v2388, %v2397
  %v2406 = vmul.f32 %v2389, %v2398
  %v2407 = vmul.f32 %v2390, %v2399
  %v2408 = vmul.f32 %v2391, %v2400
  %v2409 = vmul.f32 %v2392, %v2401
  %2411 = vset.pattern.permute.xlu0 0
  %2412 = vperm.xlu0 %2411, %v2402
  %v2413 = vpop.permute.xlu0 %2412
  %2416 = vset.pattern.permute.xlu0 0
  %2417 = vperm.xlu0 %2416, %v2403
  %v2418 = vpop.permute.xlu0 %2417
  %2421 = vset.pattern.permute.xlu0 0
  %2422 = vperm.xlu0 %2421, %v2404
  %v2423 = vpop.permute.xlu0 %2422
  %2426 = vset.pattern.permute.xlu0 0
  %2427 = vperm.xlu0 %2426, %v2405
  %v2428 = vpop.permute.xlu0 %2427
  %2431 = vset.pattern.permute.xlu0 0
  %2432 = vperm.xlu0 %2431, %v2406
  %v2433 = vpop.permute.xlu0 %2432
  %2436 = vset.pattern.permute.xlu0 0
  %2437 = vperm.xlu0 %2436, %v2407
  %v2438 = vpop.permute.xlu0 %2437
  %2441 = vset.pattern.permute.xlu0 0
  %2442 = vperm.xlu0 %2441, %v2408
  %v2443 = vpop.permute.xlu0 %2442
  %2446 = vset.pattern.permute.xlu0 0
  %2447 = vperm.xlu0 %2446, %v2409
  %v2448 = vpop.permute.xlu0 %2447
  %v2450 = vmul.f32 %v2305, %v2413
  %v2451 = vmul.f32 %v2306, %v2413
  %v2452 = vmul.f32 %v2307, %v2418
  %v2453 = vmul.f32 %v2308, %v2418
  %v2454 = vmul.f32 %v2309, %v2423
  %v2455 = vmul.f32 %v2310, %v2423
  %v2456 = vmul.f32 %v2311, %v2428
  %v2457 = vmul.f32 %v2312, %v2428
  %v2458 = vmul.f32 %v2313, %v2433
  %v2459 = vmul.f32 %v2314, %v2433
  %v2460 = vmul.f32 %v2315, %v2438
  %v2461 = vmul.f32 %v2316, %v2438
  %v2462 = vmul.f32 %v2317, %v2443
  %v2463 = vmul.f32 %v2318, %v2443
  %v2464 = vmul.f32 %v2319, %v2448
  %v2465 = vmul.f32 %v2320, %v2448
  %s2466 = scalar_lea.vmem %s2, 448
  %v2467 = vld [vmem:[%s2466] sm:$0xff]
  %v2468 = vld [vmem:[%s2466 + $0x8] sm:$0xff]
  %v2469 = vld [vmem:[%s2466 + $0x10] sm:$0xff]
  %v2470 = vld [vmem:[%s2466 + $0x18] sm:$0xff]
  %v2471 = vld [vmem:[%s2466 + $0x20] sm:$0xff]
  %v2472 = vld [vmem:[%s2466 + $0x28] sm:$0xff]
  %v2473 = vld [vmem:[%s2466 + $0x30] sm:$0xff]
  %v2474 = vld [vmem:[%s2466 + $0x38] sm:$0xff]
  %2476 = vset.pattern.permute.xlu0 0
  %2477 = vperm.xlu0 %2476, %v2467
  %v2478 = vpop.permute.xlu0 %2477
  %2481 = vset.pattern.permute.xlu0 0
  %2482 = vperm.xlu0 %2481, %v2468
  %v2483 = vpop.permute.xlu0 %2482
  %2486 = vset.pattern.permute.xlu0 0
  %2487 = vperm.xlu0 %2486, %v2469
  %v2488 = vpop.permute.xlu0 %2487
  %2491 = vset.pattern.permute.xlu0 0
  %2492 = vperm.xlu0 %2491, %v2470
  %v2493 = vpop.permute.xlu0 %2492
  %2496 = vset.pattern.permute.xlu0 0
  %2497 = vperm.xlu0 %2496, %v2471
  %v2498 = vpop.permute.xlu0 %2497
  %2501 = vset.pattern.permute.xlu0 0
  %2502 = vperm.xlu0 %2501, %v2472
  %v2503 = vpop.permute.xlu0 %2502
  %2506 = vset.pattern.permute.xlu0 0
  %2507 = vperm.xlu0 %2506, %v2473
  %v2508 = vpop.permute.xlu0 %2507
  %2511 = vset.pattern.permute.xlu0 0
  %2512 = vperm.xlu0 %2511, %v2474
  %v2513 = vpop.permute.xlu0 %2512
  %v2515 = vadd.f32 %v2450, %v2478
  %v2516 = vadd.f32 %v2451, %v2478
  %v2517 = vadd.f32 %v2452, %v2483
  %v2518 = vadd.f32 %v2453, %v2483
  %v2519 = vadd.f32 %v2454, %v2488
  %v2520 = vadd.f32 %v2455, %v2488
  %v2521 = vadd.f32 %v2456, %v2493
  %v2522 = vadd.f32 %v2457, %v2493
  %v2523 = vadd.f32 %v2458, %v2498
  %v2524 = vadd.f32 %v2459, %v2498
  %v2525 = vadd.f32 %v2460, %v2503
  %v2526 = vadd.f32 %v2461, %v2503
  %v2527 = vadd.f32 %v2462, %v2508
  %v2528 = vadd.f32 %v2463, %v2508
  %v2529 = vadd.f32 %v2464, %v2513
  %v2530 = vadd.f32 %v2465, %v2513
  %v2531 = vmax.f32 %v2515, 0.0
  %v2532 = vmax.f32 %v2516, 0.0
  %v2533 = vmax.f32 %v2517, 0.0
  %v2534 = vmax.f32 %v2518, 0.0
  %v2535 = vmax.f32 %v2519, 0.0
  %v2536 = vmax.f32 %v2520, 0.0
  %v2537 = vmax.f32 %v2521, 0.0
  %v2538 = vmax.f32 %v2522, 0.0
  %v2539 = vmax.f32 %v2523, 0.0
  %v2540 = vmax.f32 %v2524, 0.0
  %v2541 = vmax.f32 %v2525, 0.0
  %v2542 = vmax.f32 %v2526, 0.0
  %v2543 = vmax.f32 %v2527, 0.0
  %v2544 = vmax.f32 %v2528, 0.0
  %v2545 = vmax.f32 %v2529, 0.0
  %v2546 = vmax.f32 %v2530, 0.0
  %s2547 = smul.addr %s2246, 8
  %s2548 = scalar_lea.vmem %s3, %s2547
  %2549 = vst [vmem:[%s2548] sm:$0xff] %v2531
  %2550 = vst.msk [vmem:[%s2548 + $0x8] sm:$0xff] %vm33, %v2532
  %2551 = vst [vmem:[%s2548 + $0x10] sm:$0xff] %v2533
  %2552 = vst.msk [vmem:[%s2548 + $0x18] sm:$0xff] %vm33, %v2534
  %2553 = vst [vmem:[%s2548 + $0x20] sm:$0xff] %v2535
  %2554 = vst.msk [vmem:[%s2548 + $0x28] sm:$0xff] %vm33, %v2536
  %2555 = vst [vmem:[%s2548 + $0x30] sm:$0xff] %v2537
  %2556 = vst.msk [vmem:[%s2548 + $0x38] sm:$0xff] %vm33, %v2538
  %2557 = vst [vmem:[%s2548 + $0x40] sm:$0xff] %v2539
  %2558 = vst.msk [vmem:[%s2548 + $0x48] sm:$0xff] %vm33, %v2540
  %2559 = vst [vmem:[%s2548 + $0x50] sm:$0xff] %v2541
  %2560 = vst.msk [vmem:[%s2548 + $0x58] sm:$0xff] %vm33, %v2542
  %2561 = vst [vmem:[%s2548 + $0x60] sm:$0xff] %v2543
  %2562 = vst.msk [vmem:[%s2548 + $0x68] sm:$0xff] %vm33, %v2544
  %2563 = vst [vmem:[%s2548 + $0x70] sm:$0xff] %v2545
  %2564 = vst.msk [vmem:[%s2548 + $0x78] sm:$0xff] %vm33, %v2546
  // Predicated region
  $region14: #{tpu_custom_call.1} parent=0 // pred_check
    _
  $region15: #{tpu_custom_call.1} parent=0 // pred_check_branch
    %2566 = sbr.rel (0) target = $region17
  $region16: #{tpu_custom_call.1} parent=0 // pred_region
    _
  $region17: #{tpu_custom_call.1} parent=0 // pred_fallthru
    _
  // Predicated region
  $region18: #{tpu_custom_call.1} parent=0 // pred_check
    _
  $region19: #{tpu_custom_call.1} parent=0 // pred_check_branch
    %2568 = sbr.rel (0) target = $region21
  $region20: #{tpu_custom_call.1} parent=0 // pred_region
    _
  $region21: #{tpu_custom_call.1} parent=0 // pred_fallthru
    _

</llo_original>
